<compile_context>
chip_gen: v7x
topology: tpu7x:2x2x1
jax: 0.10.0
libtpu: 0.0.40
codegen_flags: <defaults>
</compile_context>

<pallas_src>
import functools

import jax
import jax.numpy as jnp
from jax.experimental import pallas as pl
from jax.experimental.pallas import tpu as pltpu


def _round_up(x, m):
    return ((x + m - 1) // m) * m


def _layer1_accumulate(x_ref, w1_ref, b1_ref, acc_ref, *, n_rows, tile_n,
                       block_start, may_overrun, use_bf16_mxu):
    """acc += sum_rows(ReLU(x_tile @ W1 + b1)) with ragged-tile masking."""
    x = x_ref[...]
    w1 = w1_ref[...]
    if use_bf16_mxu and x.dtype != jnp.bfloat16:
        # One-pass VPU cast (hidden under the tile DMA) keeps the MXU on its
        # fast bf16 path; accumulation stays f32 via preferred_element_type.
        x = x.astype(jnp.bfloat16)
        w1 = w1.astype(jnp.bfloat16)
    h1 = jnp.dot(x, w1, preferred_element_type=jnp.float32)
    h1 = jnp.maximum(h1 + b1_ref[...].astype(jnp.float32), 0.0)

    if not may_overrun:
        # Statically known: every tile is fully in range -> no mask at all.
        acc_ref[...] += jnp.sum(h1, axis=0, keepdims=True)
    else:
        @pl.when(block_start + tile_n <= n_rows)
        def _():
            acc_ref[...] += jnp.sum(h1, axis=0, keepdims=True)

        @pl.when(block_start + tile_n > n_rows)
        def _():
            # Mask AFTER bias+ReLU: padded rows would otherwise contribute
            # ReLU(b1) > 0 to the batch mean (and may contain garbage).
            row = (jax.lax.broadcasted_iota(jnp.int32, (tile_n, 1), 0)
                   + block_start)
            acc_ref[...] += jnp.sum(jnp.where(row < n_rows, h1, 0.0),
                                    axis=0, keepdims=True)


def _fused_kernel(x_ref, w1_ref, b1_ref, w2_ref, b2_ref, w3_ref, b3_ref,
                  out_ref, acc_ref, *, n_rows, tile_n, may_overrun,
                  use_bf16_mxu):
    """Single-core path: batch reduction + fused 25->25->E epilogue."""
    i = pl.program_id(0)

    @pl.when(i == 0)
    def _():
        acc_ref[...] = jnp.zeros_like(acc_ref)

    _layer1_accumulate(x_ref, w1_ref, b1_ref, acc_ref, n_rows=n_rows,
                       tile_n=tile_n, block_start=i * tile_n,
                       may_overrun=may_overrun, use_bf16_mxu=use_bf16_mxu)

    @pl.when(i == pl.num_programs(0) - 1)
    def _():
        m = acc_ref[...] * (1.0 / n_rows)                        # [1, 25]
        h2 = jnp.dot(m, w2_ref[...], preferred_element_type=jnp.float32)
        h2 = jnp.maximum(h2 + b2_ref[...], 0.0)                  # [1, 25]
        out = jnp.dot(h2, w3_ref[...], preferred_element_type=jnp.float32)
        out_ref[...] = (out + b3_ref[...]).astype(out_ref.dtype)  # [1, E]


def _partial_reduce_kernel(x_ref, w1_ref, b1_ref, partial_ref, acc_ref, *,
                           n_rows, tile_n, steps_per_core, may_overrun,
                           use_bf16_mxu):
    """Multi-core path: per-core partial row-sums of ReLU(x @ W1 + b1)."""
    c = pl.program_id(0)
    i = pl.program_id(1)

    @pl.when(i == 0)
    def _():
        acc_ref[...] = jnp.zeros_like(acc_ref)

    _layer1_accumulate(x_ref, w1_ref, b1_ref, acc_ref, n_rows=n_rows,
                       tile_n=tile_n,
                       block_start=(c * steps_per_core + i) * tile_n,
                       may_overrun=may_overrun, use_bf16_mxu=use_bf16_mxu)

    @pl.when(i == pl.num_programs(1) - 1)
    def _():
        partial_ref[...] = acc_ref[...][None, :, :]              # [1, 1, 25]


def _epilogue_kernel(partial_ref, w2_ref, b2_ref, w3_ref, b3_ref, out_ref, *,
                     n_rows):
    """Merge per-core partials, finish mean and layers 2/3."""
    m = jnp.sum(partial_ref[...], axis=0) * (1.0 / n_rows)       # [1, 25]
    h2 = jnp.dot(m, w2_ref[...], preferred_element_type=jnp.float32)
    h2 = jnp.maximum(h2 + b2_ref[...], 0.0)
    out = jnp.dot(h2, w3_ref[...], preferred_element_type=jnp.float32)
    out_ref[...] = (out + b3_ref[...]).astype(out_ref.dtype)


def _default_num_cores():
    # Shard the batch reduction across TensorCores only on multi-TC chips
    # (v7x has 2 TCs/chip); v5e/v6e keep the single fused kernel.
    try:
        kind = jax.devices()[0].device_kind.lower()
    except Exception:
        return 1
    return 2 if ("v7" in kind or "tpu7" in kind) else 1


def task_encoder_pmnist(x, params, *, tile_n=None, num_cores=None,
                        use_bf16_mxu=True):
    """x: [N, 784] (f32 or bf16). Returns [E] float32 (matches torch forward)."""
    n, d_in = x.shape
    w1, b1 = params["w1"], params["b1"]
    w2, b2 = params["w2"], params["b2"]
    w3, b3 = params["w3"], params["b3"]
    hid = w1.shape[1]
    emb = w3.shape[1]

    if num_cores is None:
        num_cores = _default_num_cores()
    num_cores = max(1, int(num_cores))

    itemsize = jnp.dtype(x.dtype).itemsize
    if tile_n is None:
        # Big tiles amortise the ~0.35 us/grid-step overhead (critical on v7x
        # where a 512-row DMA is shorter than the per-step overhead).
        tile_n = 4096 if itemsize <= 2 else 2048
    # Cap so double-buffered x tiles stay < ~24 MiB (leaves headroom in v7x's
    # smaller VMEM), clamp to the batch, and round to a sublane multiple of 8.
    max_tile = max(8, ((24 * 1024 * 1024) // (2 * d_in * itemsize)) // 8 * 8)
    tile_n = min(int(tile_n), max_tile, _round_up(n, 8))
    tile_n = _round_up(max(tile_n, 8), 8)

    n_blocks = pl.cdiv(n, tile_n)
    weight_bytes = 4 * (d_in * hid + hid + hid * hid + hid + hid * emb + emb)
    cost = pl.CostEstimate(
        flops=2 * n * d_in * hid + 2 * hid * hid + 2 * hid * emb,
        transcendentals=0,
        bytes_accessed=n * d_in * itemsize + weight_bytes + 4 * emb)

    vmem_limit = 32 * 1024 * 1024

    if num_cores == 1:
        may_overrun = n_blocks * tile_n > n
        kernel = functools.partial(_fused_kernel, n_rows=n, tile_n=tile_n,
                                   may_overrun=may_overrun,
                                   use_bf16_mxu=use_bf16_mxu)
        const2 = lambda i: (0, 0)
        out = pl.pallas_call(
            kernel,
            out_shape=jax.ShapeDtypeStruct((1, emb), jnp.float32),
            grid=(n_blocks,),
            in_specs=[
                pl.BlockSpec((tile_n, d_in), lambda i: (i, 0)),  # x, batch-tiled
                pl.BlockSpec(w1.shape, const2), pl.BlockSpec(b1.shape, const2),
                pl.BlockSpec(w2.shape, const2), pl.BlockSpec(b2.shape, const2),
                pl.BlockSpec(w3.shape, const2), pl.BlockSpec(b3.shape, const2),
            ],
            out_specs=pl.BlockSpec((1, emb), lambda i: (0, 0)),
            scratch_shapes=[pltpu.VMEM((1, hid), jnp.float32)],
            compiler_params=pltpu.CompilerParams(
                dimension_semantics=("arbitrary",),
                vmem_limit_bytes=vmem_limit),
            cost_estimate=cost,
        )(x, w1, b1, w2, b2, w3, b3)
        return out[0]

    # Multi-core path: per-core partial sums, then a tiny epilogue kernel.
    steps_per_core = pl.cdiv(n_blocks, num_cores)
    may_overrun = num_cores * steps_per_core * tile_n > n
    kernel = functools.partial(_partial_reduce_kernel, n_rows=n, tile_n=tile_n,
                               steps_per_core=steps_per_core,
                               may_overrun=may_overrun,
                               use_bf16_mxu=use_bf16_mxu)
    # Clamp the block index so trailing (fully out-of-range) steps re-read the
    # last real block; their rows are then zeroed by the ragged-row mask.
    x_map = lambda c, i: (jnp.minimum(c * steps_per_core + i, n_blocks - 1), 0)
    partials = pl.pallas_call(
        kernel,
        out_shape=jax.ShapeDtypeStruct((num_cores, 1, hid), jnp.float32),
        grid=(num_cores, steps_per_core),
        in_specs=[
            pl.BlockSpec((tile_n, d_in), x_map),
            pl.BlockSpec(w1.shape, lambda c, i: (0, 0)),
            pl.BlockSpec(b1.shape, lambda c, i: (0, 0)),
        ],
        out_specs=pl.BlockSpec((1, 1, hid), lambda c, i: (c, 0, 0)),
        scratch_shapes=[pltpu.VMEM((1, hid), jnp.float32)],
        compiler_params=pltpu.CompilerParams(
            dimension_semantics=("parallel", "arbitrary"),
            vmem_limit_bytes=vmem_limit),
        cost_estimate=cost,
    )(x, w1, b1)

    out = pl.pallas_call(
        functools.partial(_epilogue_kernel, n_rows=n),
        out_shape=jax.ShapeDtypeStruct((1, emb), jnp.float32),
        grid=(1,),
        in_specs=[
            pl.BlockSpec(partials.shape, lambda i: (0, 0, 0)),
            pl.BlockSpec(w2.shape, lambda i: (0, 0)),
            pl.BlockSpec(b2.shape, lambda i: (0, 0)),
            pl.BlockSpec(w3.shape, lambda i: (0, 0)),
            pl.BlockSpec(b3.shape, lambda i: (0, 0)),
        ],
        out_specs=pl.BlockSpec((1, emb), lambda i: (0, 0)),
    )(partials, w2, b2, w3, b3)
    return out[0]


def init_params(key, embedding_size):
    """Deterministic synthetic parameters with the module's shapes."""
    ks = jax.random.split(key, 6)
    scale1 = 1.0 / jnp.sqrt(784.0)
    scale2 = 1.0 / jnp.sqrt(25.0)
    return {
        "w1": jax.random.uniform(ks[0], (784, 25), jnp.float32, -scale1, scale1),
        "b1": jax.random.uniform(ks[1], (1, 25), jnp.float32, -scale1, scale1),
        "w2": jax.random.uniform(ks[2], (25, 25), jnp.float32, -scale2, scale2),
        "b2": jax.random.uniform(ks[3], (1, 25), jnp.float32, -scale2, scale2),
        "w3": jax.random.uniform(ks[4], (25, embedding_size), jnp.float32,
                                 -scale2, scale2),
        "b3": jax.random.uniform(ks[5], (1, embedding_size), jnp.float32,
                                 -scale2, scale2),
    }


def reference_forward(x, params):
    """Pure-JAX reference of the PyTorch forward (all f32)."""
    h = jnp.maximum(x.astype(jnp.float32) @ params["w1"] + params["b1"][0], 0.0)
    m = jnp.mean(h, axis=0)
    h2 = jnp.maximum(m @ params["w2"] + params["b2"][0], 0.0)
    return h2 @ params["w3"] + params["b3"][0]


if __name__ == "__main__":
    key = jax.random.PRNGKey(0)
    k_x, k_p = jax.random.split(key)

    batch = 300            # non-multiple of the tile -> exercises ragged mask
    embedding_size = 32

    x = jax.random.normal(k_x, (batch, 784), dtype=jnp.float32)
    params = init_params(k_p, embedding_size)
    ref = reference_forward(x, params)

    # (a) strict f32 MXU, single fused kernel, ragged last tile.
    out = jax.block_until_ready(
        task_encoder_pmnist(x, params, tile_n=128, num_cores=1,
                            use_bf16_mxu=False))
    assert out.shape == (embedding_size,), out.shape
    assert jnp.allclose(out, ref, atol=1e-4, rtol=1e-4), (out, ref)

    # (b) strict f32, forced 2-way core-split reduction (also valid on 1-TC
    #     chips; exercises the clamped fully-out-of-range trailing tile).
    out = jax.block_until_ready(
        task_encoder_pmnist(x, params, tile_n=128, num_cores=2,
                            use_bf16_mxu=False))
    assert jnp.allclose(out, ref, atol=1e-4, rtol=1e-4), (out, ref)

    # (c) default performance config: bf16 MXU operands, big tile, auto cores.
    out = jax.block_until_ready(task_encoder_pmnist(x, params))
    assert jnp.allclose(out, ref, atol=2e-2, rtol=2e-2), (out, ref)

    # (d) bf16 MXU + forced core split + odd block count.
    out = jax.block_until_ready(
        task_encoder_pmnist(x, params, tile_n=128, num_cores=2))
    assert jnp.allclose(out, ref, atol=2e-2, rtol=2e-2), (out, ref)

    print("KERNEL_OK")
</pallas_src>

<mosaic_0001>
module attributes {stable_mosaic.version = 11 : i64} {
  func.func @_fused_kernel(%arg0: i32, %arg1: memref<128x784xf32, #tpu.memory_space<vmem>>, %arg2: memref<784x25xf32, #tpu.memory_space<vmem>>, %arg3: memref<1x25xf32, #tpu.memory_space<vmem>>, %arg4: memref<25x25xf32, #tpu.memory_space<vmem>>, %arg5: memref<1x25xf32, #tpu.memory_space<vmem>>, %arg6: memref<25x32xf32, #tpu.memory_space<vmem>>, %arg7: memref<1x32xf32, #tpu.memory_space<vmem>>, %arg8: memref<1x32xf32, #tpu.memory_space<vmem>>, %arg9: memref<1x25xf32, #tpu.memory_space<vmem>>) attributes {dimension_semantics = [#tpu.dimension_semantics<arbitrary>], iteration_bounds = array<i64: 3>, scalar_prefetch = 0 : i64, scratch_operands = 1 : i64, tpu.core_type = #tpu.core_type<tc>, window_params = [{transform_indices = @transform_0, window_bounds = array<i64: 128, 784>}, {pipeline_mode = #tpu.pipeline_mode<synchronous>, transform_indices = @transform_1, window_bounds = array<i64: 784, 25>}, {pipeline_mode = #tpu.pipeline_mode<synchronous>, transform_indices = @transform_2, window_bounds = array<i64: 1, 25>}, {pipeline_mode = #tpu.pipeline_mode<synchronous>, transform_indices = @transform_3, window_bounds = array<i64: 25, 25>}, {pipeline_mode = #tpu.pipeline_mode<synchronous>, transform_indices = @transform_4, window_bounds = array<i64: 1, 25>}, {pipeline_mode = #tpu.pipeline_mode<synchronous>, transform_indices = @transform_5, window_bounds = array<i64: 25, 32>}, {pipeline_mode = #tpu.pipeline_mode<synchronous>, transform_indices = @transform_6, window_bounds = array<i64: 1, 32>}, {pipeline_mode = #tpu.pipeline_mode<synchronous>, transform_indices = @transform_7, window_bounds = array<i64: 1, 32>}]} {
    %c0_i32 = arith.constant 0 : i32
    %0 = arith.cmpi eq, %arg0, %c0_i32 : i32
    %1 = arith.extui %0 : i1 to i32
    %c0_i32_0 = arith.constant 0 : i32
    %2 = arith.cmpi ne, %1, %c0_i32_0 : i32
    scf.if %2 {
      %cst_13 = arith.constant 0.000000e+00 : f32
      %23 = vector.broadcast %cst_13 : f32 to vector<1x25xf32>
      %c0_14 = arith.constant 0 : index
      %c0_15 = arith.constant 0 : index
      %24 = vector.load %arg9[%c0_14, %c0_15] : memref<1x25xf32, #tpu.memory_space<vmem>>, vector<1x25xf32>
      tpu.vector_store %arg9[%c0_14, %c0_15], %23 {strides = array<i32>} : memref<1x25xf32, #tpu.memory_space<vmem>>, vector<1x25xf32>,
    } else {
    }
    %c128_i32 = arith.constant 128 : i32
    %3 = arith.muli %arg0, %c128_i32 : i32
    %c0 = arith.constant 0 : index
    %c0_1 = arith.constant 0 : index
    %4 = vector.load %arg1[%c0, %c0_1] : memref<128x784xf32, #tpu.memory_space<vmem>>, vector<128x784xf32>
    %c0_2 = arith.constant 0 : index
    %c0_3 = arith.constant 0 : index
    %5 = vector.load %arg2[%c0_2, %c0_3] : memref<784x25xf32, #tpu.memory_space<vmem>>, vector<784x25xf32>
    %cst = arith.constant dense<0.000000e+00> : vector<128x25xf32>
    %6 = tpu.matmul %4, %5, %cst {dimension_numbers = #tpu.dot_dimension_numbers<[1], [0], [0], [1], [0, 0, 1, 1], [], []>} : vector<128x784xf32>, vector<784x25xf32>, vector<128x25xf32> -> vector<128x25xf32>
    %c0_4 = arith.constant 0 : index
    %c0_5 = arith.constant 0 : index
    %7 = vector.load %arg3[%c0_4, %c0_5] : memref<1x25xf32, #tpu.memory_space<vmem>>, vector<1x25xf32>
    %8 = vector.broadcast %7 : vector<1x25xf32> to vector<128x25xf32>
    %9 = arith.addf %6, %8 : vector<128x25xf32>
    %cst_6 = arith.constant 0.000000e+00 : f32
    %10 = vector.broadcast %cst_6 : f32 to vector<128x25xf32>
    %11 = arith.maximumf %9, %10 : vector<128x25xf32>
    %c128_i32_7 = arith.constant 128 : i32
    %12 = arith.addi %3, %c128_i32_7 : i32
    %c300_i32 = arith.constant 300 : i32
    %13 = arith.cmpi sle, %12, %c300_i32 : i32
    %14 = arith.extui %13 : i1 to i32
    %c0_i32_8 = arith.constant 0 : i32
    %15 = arith.cmpi ne, %14, %c0_i32_8 : i32
    scf.if %15 {
      %c0_13 = arith.constant 0 : index
      %c0_14 = arith.constant 0 : index
      %23 = vector.load %arg9[%c0_13, %c0_14] : memref<1x25xf32, #tpu.memory_space<vmem>>, vector<1x25xf32>
      %cst_15 = arith.constant dense<0.000000e+00> : vector<25xf32>
      %24 = vector.multi_reduction <add>, %11, %cst_15 [0] : vector<128x25xf32> to vector<25xf32>
      %25 = vector.shape_cast %24 : vector<25xf32> to vector<1x25xf32>
      %26 = arith.addf %23, %25 : vector<1x25xf32>
      %c0_16 = arith.constant 0 : index
      %c0_17 = arith.constant 0 : index
      %27 = vector.load %arg9[%c0_16, %c0_17] : memref<1x25xf32, #tpu.memory_space<vmem>>, vector<1x25xf32>
      tpu.vector_store %arg9[%c0_16, %c0_17], %26 {strides = array<i32>} : memref<1x25xf32, #tpu.memory_space<vmem>>, vector<1x25xf32>,
    } else {
    }
    %c128_i32_9 = arith.constant 128 : i32
    %16 = arith.addi %3, %c128_i32_9 : i32
    %c300_i32_10 = arith.constant 300 : i32
    %17 = arith.cmpi sgt, %16, %c300_i32_10 : i32
    %18 = arith.extui %17 : i1 to i32
    %c0_i32_11 = arith.constant 0 : i32
    %19 = arith.cmpi ne, %18, %c0_i32_11 : i32
    scf.if %19 {
      %23 = tpu.iota {dimensions = array<i32: 0>} : vector<128x1xi32>
      %24 = vector.broadcast %3 : i32 to vector<128x1xi32>
      %25 = arith.addi %23, %24 : vector<128x1xi32>
      %c0_13 = arith.constant 0 : index
      %c0_14 = arith.constant 0 : index
      %26 = vector.load %arg9[%c0_13, %c0_14] : memref<1x25xf32, #tpu.memory_space<vmem>>, vector<1x25xf32>
      %c300_i32_15 = arith.constant 300 : i32
      %27 = vector.broadcast %c300_i32_15 : i32 to vector<128x1xi32>
      %28 = arith.cmpi slt, %25, %27 : vector<128x1xi32>
      %cst_16 = arith.constant 0.000000e+00 : f32
      %29 = vector.shape_cast %28 : vector<128x1xi1> to vector<128x1xi1>
      %30 = vector.broadcast %29 : vector<128x1xi1> to vector<128x25xi1>
      %31 = vector.broadcast %cst_16 : f32 to vector<128x25xf32>
      %32 = arith.select %30, %11, %31 : vector<128x25xi1>, vector<128x25xf32>
      %cst_17 = arith.constant dense<0.000000e+00> : vector<25xf32>
      %33 = vector.multi_reduction <add>, %32, %cst_17 [0] : vector<128x25xf32> to vector<25xf32>
      %34 = vector.shape_cast %33 : vector<25xf32> to vector<1x25xf32>
      %35 = arith.addf %26, %34 : vector<1x25xf32>
      %c0_18 = arith.constant 0 : index
      %c0_19 = arith.constant 0 : index
      %36 = vector.load %arg9[%c0_18, %c0_19] : memref<1x25xf32, #tpu.memory_space<vmem>>, vector<1x25xf32>
      tpu.vector_store %arg9[%c0_18, %c0_19], %35 {strides = array<i32>} : memref<1x25xf32, #tpu.memory_space<vmem>>, vector<1x25xf32>,
    } else {
    }
    %c2_i32 = arith.constant 2 : i32
    %20 = arith.cmpi eq, %arg0, %c2_i32 : i32
    %21 = arith.extui %20 : i1 to i32
    %c0_i32_12 = arith.constant 0 : i32
    %22 = arith.cmpi ne, %21, %c0_i32_12 : i32
    scf.if %22 {
      %c0_13 = arith.constant 0 : index
      %c0_14 = arith.constant 0 : index
      %23 = vector.load %arg9[%c0_13, %c0_14] : memref<1x25xf32, #tpu.memory_space<vmem>>, vector<1x25xf32>
      %cst_15 = arith.constant 0.00333333341 : f32
      %24 = vector.broadcast %cst_15 : f32 to vector<1x25xf32>
      %25 = arith.mulf %23, %24 : vector<1x25xf32>
      %c0_16 = arith.constant 0 : index
      %c0_17 = arith.constant 0 : index
      %26 = vector.load %arg4[%c0_16, %c0_17] : memref<25x25xf32, #tpu.memory_space<vmem>>, vector<25x25xf32>
      %cst_18 = arith.constant dense<0.000000e+00> : vector<1x25xf32>
      %27 = tpu.matmul %25, %26, %cst_18 {dimension_numbers = #tpu.dot_dimension_numbers<[1], [0], [0], [1], [0, 0, 1, 1], [], []>} : vector<1x25xf32>, vector<25x25xf32>, vector<1x25xf32> -> vector<1x25xf32>
      %c0_19 = arith.constant 0 : index
      %c0_20 = arith.constant 0 : index
      %28 = vector.load %arg5[%c0_19, %c0_20] : memref<1x25xf32, #tpu.memory_space<vmem>>, vector<1x25xf32>
      %29 = arith.addf %27, %28 : vector<1x25xf32>
      %cst_21 = arith.constant 0.000000e+00 : f32
      %30 = vector.broadcast %cst_21 : f32 to vector<1x25xf32>
      %31 = arith.maximumf %29, %30 : vector<1x25xf32>
      %c0_22 = arith.constant 0 : index
      %c0_23 = arith.constant 0 : index
      %32 = vector.load %arg6[%c0_22, %c0_23] : memref<25x32xf32, #tpu.memory_space<vmem>>, vector<25x32xf32>
      %cst_24 = arith.constant dense<0.000000e+00> : vector<1x32xf32>
      %33 = tpu.matmul %31, %32, %cst_24 {dimension_numbers = #tpu.dot_dimension_numbers<[1], [0], [0], [1], [0, 0, 1, 1], [], []>} : vector<1x25xf32>, vector<25x32xf32>, vector<1x32xf32> -> vector<1x32xf32>
      %c0_25 = arith.constant 0 : index
      %c0_26 = arith.constant 0 : index
      %34 = vector.load %arg7[%c0_25, %c0_26] : memref<1x32xf32, #tpu.memory_space<vmem>>, vector<1x32xf32>
      %35 = arith.addf %33, %34 : vector<1x32xf32>
      %c0_27 = arith.constant 0 : index
      %c0_28 = arith.constant 0 : index
      %36 = vector.load %arg8[%c0_27, %c0_28] : memref<1x32xf32, #tpu.memory_space<vmem>>, vector<1x32xf32>
      tpu.vector_store %arg8[%c0_27, %c0_28], %35 {strides = array<i32>} : memref<1x32xf32, #tpu.memory_space<vmem>>, vector<1x32xf32>,
    } else {
    }
    return
  }
  func.func @transform_0(%arg0: i32) -> (i32, i32) {
    %c0_i32 = arith.constant 0 : i32
    %c0_i32_0 = arith.constant 0 : i32
    return %arg0, %c0_i32 : i32, i32
  }
  func.func @transform_1(%arg0: i32) -> (i32, i32) {
    %c0_i32 = arith.constant 0 : i32
    %c0_i32_0 = arith.constant 0 : i32
    %c0_i32_1 = arith.constant 0 : i32
    return %c0_i32, %c0_i32_0 : i32, i32
  }
  func.func @transform_2(%arg0: i32) -> (i32, i32) {
    %c0_i32 = arith.constant 0 : i32
    %c0_i32_0 = arith.constant 0 : i32
    %c0_i32_1 = arith.constant 0 : i32
    return %c0_i32, %c0_i32_0 : i32, i32
  }
  func.func @transform_3(%arg0: i32) -> (i32, i32) {
    %c0_i32 = arith.constant 0 : i32
    %c0_i32_0 = arith.constant 0 : i32
    %c0_i32_1 = arith.constant 0 : i32
    return %c0_i32, %c0_i32_0 : i32, i32
  }
  func.func @transform_4(%arg0: i32) -> (i32, i32) {
    %c0_i32 = arith.constant 0 : i32
    %c0_i32_0 = arith.constant 0 : i32
    %c0_i32_1 = arith.constant 0 : i32
    return %c0_i32, %c0_i32_0 : i32, i32
  }
  func.func @transform_5(%arg0: i32) -> (i32, i32) {
    %c0_i32 = arith.constant 0 : i32
    %c0_i32_0 = arith.constant 0 : i32
    %c0_i32_1 = arith.constant 0 : i32
    return %c0_i32, %c0_i32_0 : i32, i32
  }
  func.func @transform_6(%arg0: i32) -> (i32, i32) {
    %c0_i32 = arith.constant 0 : i32
    %c0_i32_0 = arith.constant 0 : i32
    %c0_i32_1 = arith.constant 0 : i32
    return %c0_i32, %c0_i32_0 : i32, i32
  }
  func.func @transform_7(%arg0: i32) -> (i32, i32) {
    %c0_i32 = arith.constant 0 : i32
    %c0_i32_0 = arith.constant 0 : i32
    %c0_i32_1 = arith.constant 0 : i32
    return %c0_i32, %c0_i32_0 : i32, i32
  }
}

</mosaic_0001>

<llo_original>
// kernel: tpu_custom_call.1
$region0: #{tpu_custom_call.1}
  #allocation0 [shape = 'u32[]', space=smem, size = 0x4, offset = 0x4, fixed_abs, tag = 'smem constant byte address 0x4 - core index']
  #allocation1 [shape = 'u32[144,128]{1,0:T(1,128)}', space=vmem, size = 0x12000, scoped, tag = 'internal scratch']
  #allocation2 [shape = 'f32[1,25]{1,0:T(1,128)}', space=vmem, size = 0x200, scoped, tag = 'scratch operand']
  %s0 = inlined_call_operand.hbm [shape: f32[300,784], index: 0, kind: input, shape index: {}]
  %s1 = inlined_call_operand.vmem [shape: f32[784,25], index: 1, kind: input, shape index: {}]
  %s2 = inlined_call_operand.hbm [shape: f32[1,25], index: 2, kind: input, shape index: {}]
  %s3 = inlined_call_operand.hbm [shape: f32[25,25], index: 3, kind: input, shape index: {}]
  %s4 = inlined_call_operand.hbm [shape: f32[1,25], index: 4, kind: input, shape index: {}]
  %s5 = inlined_call_operand.hbm [shape: f32[25,32], index: 5, kind: input, shape index: {}]
  %s6 = inlined_call_operand.hbm [shape: f32[1,32], index: 6, kind: input, shape index: {}]
  %s7 = inlined_call_operand.hbm [shape: f32[1,32], index: 7, kind: output, shape index: {}]
  %s8 = sld [smem:[#allocation0]]
  $region101: #{tpu_custom_call.1} parent=0
    _
  %s10 = ssub.s32 1, %s8
  %s11 = scalar_select 0, %s10, %s8
  $region1: #{tpu_custom_call.1} parent=0
    #allocation3 [shape = 'u8[917504]{0}', space=vmem, size = 0xe0000, scoped, tag = 'input window, operand 0']
    #allocation4 [shape = 's32[2]{0}', space=sflag, size = 0x8, scoped, tag = 'scoped memory for tpu_custom_call.1']
    #allocation5 [shape = 's32[2]{0}', space=sflag, size = 0x8, scoped, tag = 'scoped memory for tpu_custom_call.1']
    #allocation6 [shape = 'u8[512]{0}', space=vmem, size = 0x400, scoped, tag = 'input window, operand 2, single buffered']
    #allocation7 [shape = 's32[1]{0}', space=sflag, size = 0x4, scoped, tag = 'scoped memory for tpu_custom_call.1']
    #allocation8 [shape = 'u8[16384]{0}', space=vmem, size = 0x4000, scoped, tag = 'input window, operand 3, single buffered']
    #allocation9 [shape = 'u8[512]{0}', space=vmem, size = 0x400, scoped, tag = 'input window, operand 4, single buffered']
    #allocation10 [shape = 's32[1]{0}', space=sflag, size = 0x4, scoped, tag = 'scoped memory for tpu_custom_call.1']
    #allocation11 [shape = 'u8[16384]{0}', space=vmem, size = 0x4000, scoped, tag = 'input window, operand 5, single buffered']
    #allocation12 [shape = 'u8[512]{0}', space=vmem, size = 0x400, scoped, tag = 'input window, operand 6, single buffered']
    #allocation13 [shape = 's32[1]{0}', space=sflag, size = 0x4, scoped, tag = 'scoped memory for tpu_custom_call.1']
    #allocation14 [shape = 'u8[512]{0}', space=vmem, size = 0x400, scoped, tag = 'output window, operand 0, single buffered']
    %12 = vsyncpa [#allocation4], 0
    %s13 = scalar_lea.sflag [#allocation4], 1
    %14 = vsyncpa %s13, 0
    %15 = vsyncpa [#allocation7], 0
    %16 = vsyncpa [#allocation10], 0
    %17 = vsyncpa [#allocation13], 0
    %18 = vsyncpa [#allocation5], 0
    loop: start=0, step=1, limit=5
    $region2: #{tpu_custom_call.1} parent=1 // loop_pre_header
      _
    $region3: #{tpu_custom_call.1} parent=1 // loop_header
      %s20 = sphi 0, %s24
      %p21 = scmp.ge.s32.totalorder %s20, 5
      %s30 = sphi 0, %s32
      %s33 = sphi 0, %s30
      %s34 = sphi 0, %s33
      %s50 = sphi 0, %s34
      %s54 = sphi 0, %s54
      %s56 = sphi 0, %s54
      %s57 = sphi 0, %s56
      %s71 = sphi 0, %s57
      %s75 = sphi 0, %s75
      %s77 = sphi 0, %s75
      %s78 = sphi 0, %s77
      %s92 = sphi 0, %s78
      %s96 = sphi 0, %s96
      %s98 = sphi 0, %s96
      %s99 = sphi 0, %s98
      %s113 = sphi 0, %s99
      %s117 = sphi 0, %s117
      %s119 = sphi 0, %s117
      %s120 = sphi 0, %s119
      %s134 = sphi 0, %s120
      %s138 = sphi 0, %s138
      %s140 = sphi 0, %s138
      %s141 = sphi 0, %s140
      %s155 = sphi 0, %s141
      %s159 = sphi 0, %s159
      %s161 = sphi 0, %s159
      %s162 = sphi 0, %s161
      %s176 = sphi 0, %s162
      %s180 = sphi 0, %s180
      %s182 = sphi 0, %s180
      %s183 = sphi 0, %s182
      %s197 = sphi 0, %s183
    $region4: #{tpu_custom_call.1} parent=1 // loop_header_branch
      %23 = sbr.rel (%p21) target = $region8
    $region5: #{tpu_custom_call.1} parent=1 // loop_body
      %s25 = ssub.s32 %s20, 1
      %s26 = ssub.s32 %s20, 2
      %s27 = sadd.s32 %s20, 1
      %s28 = ssub.s32 %s20, %s27
      %p29 = scmp.eq.s32.totalorder %s28, 0
      %s31 = sadd.s32 %s30, 1
      %s32 = scalar_select %p29, %s30, %s31
      %p35 = pneg %p29
      %p36 = scmp.eq.s32.totalorder %s20, 2
      %p37 = por %p35, %p36
      %p38 = scmp.ne.s32.totalorder %s30, %s33
      %p39 = scmp.eq.s32.totalorder %s20, 0
      %p40 = por %p38, %p39
      %p41 = scmp.ne.s32.totalorder %s30, %s33
      %p42 = scmp.eq.s32.totalorder %s25, 2
      %p43 = por %p41, %p42
      %p44 = scmp.ne.s32.totalorder %s33, %s34
      %p45 = scmp.eq.s32.totalorder %s25, 0
      %p46 = por %p44, %p45
      %p47 = scmp.ne.s32.totalorder %s33, %s34
      %p48 = scmp.eq.s32.totalorder %s26, 2
      %p49 = por %p47, %p48
      %p51 = scmp.ne.s32.totalorder %s34, %s50
      %p52 = scmp.eq.s32.totalorder %s26, 0
      %p53 = por %p51, %p52
      %s55 = sadd.s32 %s54, 1
      %p58 = scmp.eq.s32.totalorder %s20, 2
      %p59 = scmp.ne.s32.totalorder %s54, %s56
      %p60 = scmp.eq.s32.totalorder %s20, 0
      %p61 = por %p59, %p60
      %p62 = scmp.ne.s32.totalorder %s54, %s56
      %p63 = scmp.eq.s32.totalorder %s25, 2
      %p64 = por %p62, %p63
      %p65 = scmp.ne.s32.totalorder %s56, %s57
      %p66 = scmp.eq.s32.totalorder %s25, 0
      %p67 = por %p65, %p66
      %p68 = scmp.ne.s32.totalorder %s56, %s57
      %p69 = scmp.eq.s32.totalorder %s26, 2
      %p70 = por %p68, %p69
      %p72 = scmp.ne.s32.totalorder %s57, %s71
      %p73 = scmp.eq.s32.totalorder %s26, 0
      %p74 = por %p72, %p73
      %s76 = sadd.s32 %s75, 1
      %p79 = scmp.eq.s32.totalorder %s20, 2
      %p80 = scmp.ne.s32.totalorder %s75, %s77
      %p81 = scmp.eq.s32.totalorder %s20, 0
      %p82 = por %p80, %p81
      %p83 = scmp.ne.s32.totalorder %s75, %s77
      %p84 = scmp.eq.s32.totalorder %s25, 2
      %p85 = por %p83, %p84
      %p86 = scmp.ne.s32.totalorder %s77, %s78
      %p87 = scmp.eq.s32.totalorder %s25, 0
      %p88 = por %p86, %p87
      %p89 = scmp.ne.s32.totalorder %s77, %s78
      %p90 = scmp.eq.s32.totalorder %s26, 2
      %p91 = por %p89, %p90
      %p93 = scmp.ne.s32.totalorder %s78, %s92
      %p94 = scmp.eq.s32.totalorder %s26, 0
      %p95 = por %p93, %p94
      %s97 = sadd.s32 %s96, 1
      %p100 = scmp.eq.s32.totalorder %s20, 2
      %p101 = scmp.ne.s32.totalorder %s96, %s98
      %p102 = scmp.eq.s32.totalorder %s20, 0
      %p103 = por %p101, %p102
      %p104 = scmp.ne.s32.totalorder %s96, %s98
      %p105 = scmp.eq.s32.totalorder %s25, 2
      %p106 = por %p104, %p105
      %p107 = scmp.ne.s32.totalorder %s98, %s99
      %p108 = scmp.eq.s32.totalorder %s25, 0
      %p109 = por %p107, %p108
      %p110 = scmp.ne.s32.totalorder %s98, %s99
      %p111 = scmp.eq.s32.totalorder %s26, 2
      %p112 = por %p110, %p111
      %p114 = scmp.ne.s32.totalorder %s99, %s113
      %p115 = scmp.eq.s32.totalorder %s26, 0
      %p116 = por %p114, %p115
      %s118 = sadd.s32 %s117, 1
      %p121 = scmp.eq.s32.totalorder %s20, 2
      %p122 = scmp.ne.s32.totalorder %s117, %s119
      %p123 = scmp.eq.s32.totalorder %s20, 0
      %p124 = por %p122, %p123
      %p125 = scmp.ne.s32.totalorder %s117, %s119
      %p126 = scmp.eq.s32.totalorder %s25, 2
      %p127 = por %p125, %p126
      %p128 = scmp.ne.s32.totalorder %s119, %s120
      %p129 = scmp.eq.s32.totalorder %s25, 0
      %p130 = por %p128, %p129
      %p131 = scmp.ne.s32.totalorder %s119, %s120
      %p132 = scmp.eq.s32.totalorder %s26, 2
      %p133 = por %p131, %p132
      %p135 = scmp.ne.s32.totalorder %s120, %s134
      %p136 = scmp.eq.s32.totalorder %s26, 0
      %p137 = por %p135, %p136
      %s139 = sadd.s32 %s138, 1
      %p142 = scmp.eq.s32.totalorder %s20, 2
      %p143 = scmp.ne.s32.totalorder %s138, %s140
      %p144 = scmp.eq.s32.totalorder %s20, 0
      %p145 = por %p143, %p144
      %p146 = scmp.ne.s32.totalorder %s138, %s140
      %p147 = scmp.eq.s32.totalorder %s25, 2
      %p148 = por %p146, %p147
      %p149 = scmp.ne.s32.totalorder %s140, %s141
      %p150 = scmp.eq.s32.totalorder %s25, 0
      %p151 = por %p149, %p150
      %p152 = scmp.ne.s32.totalorder %s140, %s141
      %p153 = scmp.eq.s32.totalorder %s26, 2
      %p154 = por %p152, %p153
      %p156 = scmp.ne.s32.totalorder %s141, %s155
      %p157 = scmp.eq.s32.totalorder %s26, 0
      %p158 = por %p156, %p157
      %s160 = sadd.s32 %s159, 1
      %p163 = scmp.eq.s32.totalorder %s20, 2
      %p164 = scmp.ne.s32.totalorder %s159, %s161
      %p165 = scmp.eq.s32.totalorder %s20, 0
      %p166 = por %p164, %p165
      %p167 = scmp.ne.s32.totalorder %s159, %s161
      %p168 = scmp.eq.s32.totalorder %s25, 2
      %p169 = por %p167, %p168
      %p170 = scmp.ne.s32.totalorder %s161, %s162
      %p171 = scmp.eq.s32.totalorder %s25, 0
      %p172 = por %p170, %p171
      %p173 = scmp.ne.s32.totalorder %s161, %s162
      %p174 = scmp.eq.s32.totalorder %s26, 2
      %p175 = por %p173, %p174
      %p177 = scmp.ne.s32.totalorder %s162, %s176
      %p178 = scmp.eq.s32.totalorder %s26, 0
      %p179 = por %p177, %p178
      %s181 = sadd.s32 %s180, 1
      %p184 = scmp.eq.s32.totalorder %s20, 2
      %p185 = scmp.ne.s32.totalorder %s180, %s182
      %p186 = scmp.eq.s32.totalorder %s20, 0
      %p187 = por %p185, %p186
      %p188 = scmp.ne.s32.totalorder %s180, %s182
      %p189 = scmp.eq.s32.totalorder %s25, 2
      %p190 = por %p188, %p189
      %p191 = scmp.ne.s32.totalorder %s182, %s183
      %p192 = scmp.eq.s32.totalorder %s25, 0
      %p193 = por %p191, %p192
      %p194 = scmp.ne.s32.totalorder %s182, %s183
      %p195 = scmp.eq.s32.totalorder %s26, 2
      %p196 = por %p194, %p195
      %p198 = scmp.ne.s32.totalorder %s183, %s197
      %p199 = scmp.eq.s32.totalorder %s26, 0
      %p200 = por %p198, %p199
      %p201 = scmp.le.s32.totalorder 1, %s20
      %p202 = scmp.lt.s32.totalorder %s20, 4
      %p203 = pnand %p201, %p202
      %p204 = pneg %p203
      // Predicated region
      $region9: #{tpu_custom_call.1} parent=5 // pred_check
        _
      $region10: #{tpu_custom_call.1} parent=5 // pred_check_branch
        %206 = sbr.rel (%p203) target = $region12
      $region11: #{tpu_custom_call.1} parent=5 // pred_region
        %s207 = ssub.s32 %s20, 1
        // Predicated region
        $region13: #{tpu_custom_call.1} parent=11 // pred_check
          %p208 = pneg %p67
        $region14: #{tpu_custom_call.1} parent=11 // pred_check_branch
          %210 = sbr.rel (%p208) target = $region16
        $region15: #{tpu_custom_call.1} parent=11 // pred_region
          _
        $region16: #{tpu_custom_call.1} parent=11 // pred_fallthru
          _
        // Predicated region
        $region17: #{tpu_custom_call.1} parent=11 // pred_check
          %p211 = pneg %p88
        $region18: #{tpu_custom_call.1} parent=11 // pred_check_branch
          %213 = sbr.rel (%p211) target = $region20
        $region19: #{tpu_custom_call.1} parent=11 // pred_region
          %s215 = ssub.s32 16, 16
          %216 = vsyncadd [#allocation7], %s215
          %s218 = sshll.u32 [#allocation6], 4
          %s219 = int_to_ptr.vmem [resolvable:$true] %s218
          %221 = dma.hbm_to_vmem [thread:$0]  %s2, 16, %s219, [#allocation7]
        $region20: #{tpu_custom_call.1} parent=11 // pred_fallthru
          _
        // Predicated region
        $region21: #{tpu_custom_call.1} parent=11 // pred_check
          %p222 = pneg %p109
        $region22: #{tpu_custom_call.1} parent=11 // pred_check_branch
          %224 = sbr.rel (%p222) target = $region24
        $region23: #{tpu_custom_call.1} parent=11 // pred_region
          %s226 = ssub.s32 512, 512
          %227 = vsyncadd [#allocation7], %s226
          %s228 = sshll.u32 [#allocation8], 4
          %s229 = int_to_ptr.vmem [resolvable:$true] %s228
          %234 = dma.hbm_to_vmem [thread:$0]  %s3, 512, %s229, [#allocation7], 128, 128, 8
        $region24: #{tpu_custom_call.1} parent=11 // pred_fallthru
          _
        // Predicated region
        $region25: #{tpu_custom_call.1} parent=11 // pred_check
          %p235 = pneg %p130
        $region26: #{tpu_custom_call.1} parent=11 // pred_check_branch
          %237 = sbr.rel (%p235) target = $region28
        $region27: #{tpu_custom_call.1} parent=11 // pred_region
          %s239 = ssub.s32 16, 16
          %240 = vsyncadd [#allocation10], %s239
          %s242 = sshll.u32 [#allocation9], 4
          %s243 = int_to_ptr.vmem [resolvable:$true] %s242
          %245 = dma.hbm_to_vmem [thread:$0]  %s4, 16, %s243, [#allocation10]
        $region28: #{tpu_custom_call.1} parent=11 // pred_fallthru
          _
        // Predicated region
        $region29: #{tpu_custom_call.1} parent=11 // pred_check
          %p246 = pneg %p151
        $region30: #{tpu_custom_call.1} parent=11 // pred_check_branch
          %248 = sbr.rel (%p246) target = $region32
        $region31: #{tpu_custom_call.1} parent=11 // pred_region
          %s250 = ssub.s32 512, 512
          %251 = vsyncadd [#allocation10], %s250
          %s252 = sshll.u32 [#allocation11], 4
          %s253 = int_to_ptr.vmem [resolvable:$true] %s252
          %258 = dma.hbm_to_vmem [thread:$0]  %s5, 512, %s253, [#allocation10], 128, 128, 8
        $region32: #{tpu_custom_call.1} parent=11 // pred_fallthru
          _
        // Predicated region
        $region33: #{tpu_custom_call.1} parent=11 // pred_check
          %p259 = pneg %p172
        $region34: #{tpu_custom_call.1} parent=11 // pred_check_branch
          %261 = sbr.rel (%p259) target = $region36
        $region35: #{tpu_custom_call.1} parent=11 // pred_region
          %s263 = ssub.s32 16, 16
          %264 = vsyncadd [#allocation13], %s263
          %s266 = sshll.u32 [#allocation12], 4
          %s267 = int_to_ptr.vmem [resolvable:$true] %s266
          %269 = dma.hbm_to_vmem [thread:$0]  %s6, 16, %s267, [#allocation13]
        $region36: #{tpu_custom_call.1} parent=11 // pred_fallthru
          _
      $region12: #{tpu_custom_call.1} parent=5 // pred_fallthru
        _
      %p270 = scmp.lt.s32.totalorder %s20, 3
      // Predicated region
      $region37: #{tpu_custom_call.1} parent=5 // pred_check
        %p271 = pneg %p270
      $region38: #{tpu_custom_call.1} parent=5 // pred_check_branch
        %273 = sbr.rel (%p271) target = $region40
      $region39: #{tpu_custom_call.1} parent=5 // pred_region
        // Predicated region
        $region41: #{tpu_custom_call.1} parent=39 // pred_check
          %p274 = pneg %p40
        $region42: #{tpu_custom_call.1} parent=39 // pred_check_branch
          %276 = sbr.rel (%p274) target = $region44
        $region43: #{tpu_custom_call.1} parent=39 // pred_region
          %s277 = sand.u32 %s30, 1
          %s278 = scalar_lea.sflag [#allocation4], %s277
          %s279 = sand.u32 %s30, 1
          %s280 = smul.addr %s279, 896
          %s281 = scalar_lea.vmem [#allocation3], %s280
          %s282 = smul.u32 16, %s20
          %s283 = ssub.s32 38, %s282
          %p284 = scmp.lt.s32.totalorder %s283, 16
          %s285 = scalar_select %p284, %s283, 16
          %s286 = smul.u32 128, %s285
          %s287 = smul.u32 %s286, 7
          %s289 = ssub.s32 14336, %s287
          %290 = vsyncadd %s278, %s289
          %p291 = scmp.ne.s32.totalorder 0, %s287
          %s292 = smul.addr %s282, 7
          %s293 = smul.addr %s292, 128
          %s294 = scalar_lea.hbm %s0, %s293
          %s295 = smul.u32 56, %s285
          %s296 = sshll.u32 %s281, 4
          %s297 = int_to_ptr.vmem [resolvable:$true] %s296
          %s298 = sshll.u32 %s295, 4
          %302 = dma.hbm_to_vmem [thread:$0]  (%p291), %s294, %s298, %s297, %s278, 896, 896, 56
        $region44: #{tpu_custom_call.1} parent=39 // pred_fallthru
          _
      $region40: #{tpu_custom_call.1} parent=5 // pred_fallthru
        _
      %p303 = scmp.le.s32.totalorder 1, %s20
      %p304 = scmp.lt.s32.totalorder %s20, 4
      %p305 = pnand %p303, %p304
      %p306 = pneg %p305
      // Predicated region
      $region45: #{tpu_custom_call.1} parent=5 // pred_check
        _
      $region46: #{tpu_custom_call.1} parent=5 // pred_check_branch
        %308 = sbr.rel (%p305) target = $region48
      $region47: #{tpu_custom_call.1} parent=5 // pred_region
        %s309 = ssub.s32 %s20, 1
        %s310 = sand.u32 %s33, 1
        %s311 = scalar_lea.sflag [#allocation4], %s310
        %s312 = sand.u32 %s33, 1
        %s313 = smul.addr %s312, 896
        %s314 = scalar_lea.vmem [#allocation3], %s313
        // Predicated region
        $region49: #{tpu_custom_call.1} parent=47 // pred_check
          %p315 = pneg %p46
        $region50: #{tpu_custom_call.1} parent=47 // pred_check_branch
          %317 = sbr.rel (%p315) target = $region52
        $region51: #{tpu_custom_call.1} parent=47 // pred_region
          %318 = dma.done %s311, 14336
        $region52: #{tpu_custom_call.1} parent=47 // pred_fallthru
          _
        // Predicated region
        $region53: #{tpu_custom_call.1} parent=47 // pred_check
          %p319 = pneg %p88
        $region54: #{tpu_custom_call.1} parent=47 // pred_check_branch
          %321 = sbr.rel (%p319) target = $region56
        $region55: #{tpu_custom_call.1} parent=47 // pred_region
          %322 = dma.done [#allocation7], 16
        $region56: #{tpu_custom_call.1} parent=47 // pred_fallthru
          _
        // Predicated region
        $region57: #{tpu_custom_call.1} parent=47 // pred_check
          %p323 = pneg %p109
        $region58: #{tpu_custom_call.1} parent=47 // pred_check_branch
          %325 = sbr.rel (%p323) target = $region60
        $region59: #{tpu_custom_call.1} parent=47 // pred_region
          %326 = dma.done [#allocation7], 512
        $region60: #{tpu_custom_call.1} parent=47 // pred_fallthru
          _
        // Predicated region
        $region61: #{tpu_custom_call.1} parent=47 // pred_check
          %p327 = pneg %p130
        $region62: #{tpu_custom_call.1} parent=47 // pred_check_branch
          %329 = sbr.rel (%p327) target = $region64
        $region63: #{tpu_custom_call.1} parent=47 // pred_region
          %330 = dma.done [#allocation10], 16
        $region64: #{tpu_custom_call.1} parent=47 // pred_fallthru
          _
        // Predicated region
        $region65: #{tpu_custom_call.1} parent=47 // pred_check
          %p331 = pneg %p151
        $region66: #{tpu_custom_call.1} parent=47 // pred_check_branch
          %333 = sbr.rel (%p331) target = $region68
        $region67: #{tpu_custom_call.1} parent=47 // pred_region
          %334 = dma.done [#allocation10], 512
        $region68: #{tpu_custom_call.1} parent=47 // pred_fallthru
          _
        // Predicated region
        $region69: #{tpu_custom_call.1} parent=47 // pred_check
          %p335 = pneg %p172
        $region70: #{tpu_custom_call.1} parent=47 // pred_check_branch
          %337 = sbr.rel (%p335) target = $region72
        $region71: #{tpu_custom_call.1} parent=47 // pred_region
          %338 = dma.done [#allocation13], 16
        $region72: #{tpu_custom_call.1} parent=47 // pred_fallthru
          _
        %s339 = sand.u32 %s33, 1
        %s340 = scalar_lea.sflag [#allocation4], %s339
        %s341 = sand.u32 %s33, 1
        %s342 = smul.addr %s341, 896
        %s343 = scalar_lea.vmem [#allocation3], %s342
        %p344 = pneg %p46
        %p345 = pneg %p43
        %p346 = pneg %p67
        %p347 = pneg %p64
        %p348 = pneg %p88
        %p349 = pneg %p85
        %p350 = pneg %p109
        %p351 = pneg %p106
        %p352 = pneg %p130
        %p353 = pneg %p127
        %p354 = pneg %p151
        %p355 = pneg %p148
        %p356 = pneg %p172
        %p357 = pneg %p169
        %p358 = pneg %p193
        %p359 = pneg %p190
        %s360 = smul.u32 16, %s25
        %s361 = ssub.s32 38, %s360
        %p362 = scmp.lt.s32.totalorder %s361, 16
        %s363 = scalar_select %p362, %s361, 16
        %s364 = smul.u32 128, %s363
        %s365 = smul.u32 %s364, 7
        %p366 = scmp.eq.s32.totalorder %s25, 0
        // Predicated region
        $region73: #{tpu_custom_call.1} parent=47 // pred_check
          %p367 = pneg %p366
        $region74: #{tpu_custom_call.1} parent=47 // pred_check_branch
          %369 = sbr.rel (%p367) target = $region76
        $region75: #{tpu_custom_call.1} parent=47 // pred_region
          %vm370 = vcmask 196608
          %371 = vst.msk [vmem:[#allocation2] sm:$0x1] %vm370, 0.0
        $region76: #{tpu_custom_call.1} parent=47 // pred_fallthru
          _
        %s372 = smul.u32 %s25, 128
        %v373 = vld [vmem:[%s314] sm:$0xff]
        %v374 = vld [vmem:[%s314 + $0x8] sm:$0xff]
        %v375 = vld [vmem:[%s314 + $0x10] sm:$0xff]
        %v376 = vld [vmem:[%s314 + $0x18] sm:$0xff]
        %v377 = vld [vmem:[%s314 + $0x20] sm:$0xff]
        %v378 = vld [vmem:[%s314 + $0x28] sm:$0xff]
        %v379 = vld [vmem:[%s314 + $0x30] sm:$0xff]
        %v380 = vld [vmem:[%s314 + $0x38] sm:$0xff]
        %v381 = vld [vmem:[%s314 + $0x40] sm:$0xff]
        %v382 = vld [vmem:[%s314 + $0x48] sm:$0xff]
        %v383 = vld [vmem:[%s314 + $0x50] sm:$0xff]
        %v384 = vld [vmem:[%s314 + $0x58] sm:$0xff]
        %v385 = vld [vmem:[%s314 + $0x60] sm:$0xff]
        %v386 = vld [vmem:[%s314 + $0x68] sm:$0xff]
        %v387 = vld [vmem:[%s314 + $0x70] sm:$0xff]
        %v388 = vld [vmem:[%s314 + $0x78] sm:$0xff]
        %v389 = vld [vmem:[%s314 + $0x80] sm:$0xff]
        %v390 = vld [vmem:[%s314 + $0x88] sm:$0xff]
        %v391 = vld [vmem:[%s314 + $0x90] sm:$0xff]
        %v392 = vld [vmem:[%s314 + $0x98] sm:$0xff]
        %v393 = vld [vmem:[%s314 + $0xa0] sm:$0xff]
        %v394 = vld [vmem:[%s314 + $0xa8] sm:$0xff]
        %v395 = vld [vmem:[%s314 + $0xb0] sm:$0xff]
        %v396 = vld [vmem:[%s314 + $0xb8] sm:$0xff]
        %v397 = vld [vmem:[%s314 + $0xc0] sm:$0xff]
        %v398 = vld [vmem:[%s314 + $0xc8] sm:$0xff]
        %v399 = vld [vmem:[%s314 + $0xd0] sm:$0xff]
        %v400 = vld [vmem:[%s314 + $0xd8] sm:$0xff]
        %v401 = vld [vmem:[%s314 + $0xe0] sm:$0xff]
        %v402 = vld [vmem:[%s314 + $0xe8] sm:$0xff]
        %v403 = vld [vmem:[%s314 + $0xf0] sm:$0xff]
        %v404 = vld [vmem:[%s314 + $0xf8] sm:$0xff]
        %v405 = vld [vmem:[%s314 + $0x100] sm:$0xff]
        %v406 = vld [vmem:[%s314 + $0x108] sm:$0xff]
        %v407 = vld [vmem:[%s314 + $0x110] sm:$0xff]
        %v408 = vld [vmem:[%s314 + $0x118] sm:$0xff]
        %v409 = vld [vmem:[%s314 + $0x120] sm:$0xff]
        %v410 = vld [vmem:[%s314 + $0x128] sm:$0xff]
        %v411 = vld [vmem:[%s314 + $0x130] sm:$0xff]
        %v412 = vld [vmem:[%s314 + $0x138] sm:$0xff]
        %v413 = vld [vmem:[%s314 + $0x140] sm:$0xff]
        %v414 = vld [vmem:[%s314 + $0x148] sm:$0xff]
        %v415 = vld [vmem:[%s314 + $0x150] sm:$0xff]
        %v416 = vld [vmem:[%s314 + $0x158] sm:$0xff]
        %v417 = vld [vmem:[%s314 + $0x160] sm:$0xff]
        %v418 = vld [vmem:[%s314 + $0x168] sm:$0xff]
        %v419 = vld [vmem:[%s314 + $0x170] sm:$0xff]
        %v420 = vld [vmem:[%s314 + $0x178] sm:$0xff]
        %v421 = vld [vmem:[%s314 + $0x180] sm:$0xff]
        %v422 = vld [vmem:[%s314 + $0x188] sm:$0xff]
        %v423 = vld [vmem:[%s314 + $0x190] sm:$0xff]
        %v424 = vld [vmem:[%s314 + $0x198] sm:$0xff]
        %v425 = vld [vmem:[%s314 + $0x1a0] sm:$0xff]
        %v426 = vld [vmem:[%s314 + $0x1a8] sm:$0xff]
        %v427 = vld [vmem:[%s314 + $0x1b0] sm:$0xff]
        %v428 = vld [vmem:[%s314 + $0x1b8] sm:$0xff]
        %v429 = vld [vmem:[%s314 + $0x1c0] sm:$0xff]
        %v430 = vld [vmem:[%s314 + $0x1c8] sm:$0xff]
        %v431 = vld [vmem:[%s314 + $0x1d0] sm:$0xff]
        %v432 = vld [vmem:[%s314 + $0x1d8] sm:$0xff]
        %v433 = vld [vmem:[%s314 + $0x1e0] sm:$0xff]
        %v434 = vld [vmem:[%s314 + $0x1e8] sm:$0xff]
        %v435 = vld [vmem:[%s314 + $0x1f0] sm:$0xff]
        %v436 = vld [vmem:[%s314 + $0x1f8] sm:$0xff]
        %v437 = vld [vmem:[%s314 + $0x200] sm:$0xff]
        %v438 = vld [vmem:[%s314 + $0x208] sm:$0xff]
        %v439 = vld [vmem:[%s314 + $0x210] sm:$0xff]
        %v440 = vld [vmem:[%s314 + $0x218] sm:$0xff]
        %v441 = vld [vmem:[%s314 + $0x220] sm:$0xff]
        %v442 = vld [vmem:[%s314 + $0x228] sm:$0xff]
        %v443 = vld [vmem:[%s314 + $0x230] sm:$0xff]
        %v444 = vld [vmem:[%s314 + $0x238] sm:$0xff]
        %v445 = vld [vmem:[%s314 + $0x240] sm:$0xff]
        %v446 = vld [vmem:[%s314 + $0x248] sm:$0xff]
        %v447 = vld [vmem:[%s314 + $0x250] sm:$0xff]
        %v448 = vld [vmem:[%s314 + $0x258] sm:$0xff]
        %v449 = vld [vmem:[%s314 + $0x260] sm:$0xff]
        %v450 = vld [vmem:[%s314 + $0x268] sm:$0xff]
        %v451 = vld [vmem:[%s314 + $0x270] sm:$0xff]
        %v452 = vld [vmem:[%s314 + $0x278] sm:$0xff]
        %v453 = vld [vmem:[%s314 + $0x280] sm:$0xff]
        %v454 = vld [vmem:[%s314 + $0x288] sm:$0xff]
        %v455 = vld [vmem:[%s314 + $0x290] sm:$0xff]
        %v456 = vld [vmem:[%s314 + $0x298] sm:$0xff]
        %v457 = vld [vmem:[%s314 + $0x2a0] sm:$0xff]
        %v458 = vld [vmem:[%s314 + $0x2a8] sm:$0xff]
        %v459 = vld [vmem:[%s314 + $0x2b0] sm:$0xff]
        %v460 = vld [vmem:[%s314 + $0x2b8] sm:$0xff]
        %v461 = vld [vmem:[%s314 + $0x2c0] sm:$0xff]
        %v462 = vld [vmem:[%s314 + $0x2c8] sm:$0xff]
        %v463 = vld [vmem:[%s314 + $0x2d0] sm:$0xff]
        %v464 = vld [vmem:[%s314 + $0x2d8] sm:$0xff]
        %v465 = vld [vmem:[%s314 + $0x2e0] sm:$0xff]
        %v466 = vld [vmem:[%s314 + $0x2e8] sm:$0xff]
        %v467 = vld [vmem:[%s314 + $0x2f0] sm:$0xff]
        %v468 = vld [vmem:[%s314 + $0x2f8] sm:$0xff]
        %v469 = vld [vmem:[%s314 + $0x300] sm:$0xff]
        %v470 = vld [vmem:[%s314 + $0x308] sm:$0xff]
        %v471 = vld [vmem:[%s314 + $0x310] sm:$0xff]
        %v472 = vld [vmem:[%s314 + $0x318] sm:$0xff]
        %v473 = vld [vmem:[%s314 + $0x320] sm:$0xff]
        %v474 = vld [vmem:[%s314 + $0x328] sm:$0xff]
        %v475 = vld [vmem:[%s314 + $0x330] sm:$0xff]
        %v476 = vld [vmem:[%s314 + $0x338] sm:$0xff]
        %v477 = vld [vmem:[%s314 + $0x340] sm:$0xff]
        %v478 = vld [vmem:[%s314 + $0x348] sm:$0xff]
        %v479 = vld [vmem:[%s314 + $0x350] sm:$0xff]
        %v480 = vld [vmem:[%s314 + $0x358] sm:$0xff]
        %v481 = vld [vmem:[%s314 + $0x360] sm:$0xff]
        %v482 = vld [vmem:[%s314 + $0x368] sm:$0xff]
        %v483 = vld [vmem:[%s314 + $0x370] sm:$0xff]
        %v484 = vld [vmem:[%s314 + $0x378] sm:$0xff]
        %v485 = vld [vmem:[%s1] sm:$0xff]
        %v486 = vld [vmem:[%s1 + $0x8] sm:$0xff]
        %v487 = vld [vmem:[%s1 + $0x10] sm:$0xff]
        %v488 = vld [vmem:[%s1 + $0x18] sm:$0xff]
        %v489 = vld [vmem:[%s1 + $0x20] sm:$0xff]
        %v490 = vld [vmem:[%s1 + $0x28] sm:$0xff]
        %v491 = vld [vmem:[%s1 + $0x30] sm:$0xff]
        %v492 = vld [vmem:[%s1 + $0x38] sm:$0xff]
        %v493 = vld [vmem:[%s1 + $0x40] sm:$0xff]
        %v494 = vld [vmem:[%s1 + $0x48] sm:$0xff]
        %v495 = vld [vmem:[%s1 + $0x50] sm:$0xff]
        %v496 = vld [vmem:[%s1 + $0x58] sm:$0xff]
        %v497 = vld [vmem:[%s1 + $0x60] sm:$0xff]
        %v498 = vld [vmem:[%s1 + $0x68] sm:$0xff]
        %v499 = vld [vmem:[%s1 + $0x70] sm:$0xff]
        %v500 = vld [vmem:[%s1 + $0x78] sm:$0xff]
        %v501 = vld [vmem:[%s1 + $0x80] sm:$0xff]
        %v502 = vld [vmem:[%s1 + $0x88] sm:$0xff]
        %v503 = vld [vmem:[%s1 + $0x90] sm:$0xff]
        %v504 = vld [vmem:[%s1 + $0x98] sm:$0xff]
        %v505 = vld [vmem:[%s1 + $0xa0] sm:$0xff]
        %v506 = vld [vmem:[%s1 + $0xa8] sm:$0xff]
        %v507 = vld [vmem:[%s1 + $0xb0] sm:$0xff]
        %v508 = vld [vmem:[%s1 + $0xb8] sm:$0xff]
        %v509 = vld [vmem:[%s1 + $0xc0] sm:$0xff]
        %v510 = vld [vmem:[%s1 + $0xc8] sm:$0xff]
        %v511 = vld [vmem:[%s1 + $0xd0] sm:$0xff]
        %v512 = vld [vmem:[%s1 + $0xd8] sm:$0xff]
        %v513 = vld [vmem:[%s1 + $0xe0] sm:$0xff]
        %v514 = vld [vmem:[%s1 + $0xe8] sm:$0xff]
        %v515 = vld [vmem:[%s1 + $0xf0] sm:$0xff]
        %v516 = vld [vmem:[%s1 + $0xf8] sm:$0xff]
        %v517 = vld [vmem:[%s1 + $0x100] sm:$0xff]
        %v518 = vld [vmem:[%s1 + $0x108] sm:$0xff]
        %v519 = vld [vmem:[%s1 + $0x110] sm:$0xff]
        %v520 = vld [vmem:[%s1 + $0x118] sm:$0xff]
        %v521 = vld [vmem:[%s1 + $0x120] sm:$0xff]
        %v522 = vld [vmem:[%s1 + $0x128] sm:$0xff]
        %v523 = vld [vmem:[%s1 + $0x130] sm:$0xff]
        %v524 = vld [vmem:[%s1 + $0x138] sm:$0xff]
        %v525 = vld [vmem:[%s1 + $0x140] sm:$0xff]
        %v526 = vld [vmem:[%s1 + $0x148] sm:$0xff]
        %v527 = vld [vmem:[%s1 + $0x150] sm:$0xff]
        %v528 = vld [vmem:[%s1 + $0x158] sm:$0xff]
        %v529 = vld [vmem:[%s1 + $0x160] sm:$0xff]
        %v530 = vld [vmem:[%s1 + $0x168] sm:$0xff]
        %v531 = vld [vmem:[%s1 + $0x170] sm:$0xff]
        %v532 = vld [vmem:[%s1 + $0x178] sm:$0xff]
        %v533 = vld [vmem:[%s1 + $0x180] sm:$0xff]
        %v534 = vld [vmem:[%s1 + $0x188] sm:$0xff]
        %v535 = vld [vmem:[%s1 + $0x190] sm:$0xff]
        %v536 = vld [vmem:[%s1 + $0x198] sm:$0xff]
        %v537 = vld [vmem:[%s1 + $0x1a0] sm:$0xff]
        %v538 = vld [vmem:[%s1 + $0x1a8] sm:$0xff]
        %v539 = vld [vmem:[%s1 + $0x1b0] sm:$0xff]
        %v540 = vld [vmem:[%s1 + $0x1b8] sm:$0xff]
        %v541 = vld [vmem:[%s1 + $0x1c0] sm:$0xff]
        %v542 = vld [vmem:[%s1 + $0x1c8] sm:$0xff]
        %v543 = vld [vmem:[%s1 + $0x1d0] sm:$0xff]
        %v544 = vld [vmem:[%s1 + $0x1d8] sm:$0xff]
        %v545 = vld [vmem:[%s1 + $0x1e0] sm:$0xff]
        %v546 = vld [vmem:[%s1 + $0x1e8] sm:$0xff]
        %v547 = vld [vmem:[%s1 + $0x1f0] sm:$0xff]
        %v548 = vld [vmem:[%s1 + $0x1f8] sm:$0xff]
        %v549 = vld [vmem:[%s1 + $0x200] sm:$0xff]
        %v550 = vld [vmem:[%s1 + $0x208] sm:$0xff]
        %v551 = vld [vmem:[%s1 + $0x210] sm:$0xff]
        %v552 = vld [vmem:[%s1 + $0x218] sm:$0xff]
        %v553 = vld [vmem:[%s1 + $0x220] sm:$0xff]
        %v554 = vld [vmem:[%s1 + $0x228] sm:$0xff]
        %v555 = vld [vmem:[%s1 + $0x230] sm:$0xff]
        %v556 = vld [vmem:[%s1 + $0x238] sm:$0xff]
        %v557 = vld [vmem:[%s1 + $0x240] sm:$0xff]
        %v558 = vld [vmem:[%s1 + $0x248] sm:$0xff]
        %v559 = vld [vmem:[%s1 + $0x250] sm:$0xff]
        %v560 = vld [vmem:[%s1 + $0x258] sm:$0xff]
        %v561 = vld [vmem:[%s1 + $0x260] sm:$0xff]
        %v562 = vld [vmem:[%s1 + $0x268] sm:$0xff]
        %v563 = vld [vmem:[%s1 + $0x270] sm:$0xff]
        %v564 = vld [vmem:[%s1 + $0x278] sm:$0xff]
        %v565 = vld [vmem:[%s1 + $0x280] sm:$0xff]
        %v566 = vld [vmem:[%s1 + $0x288] sm:$0xff]
        %v567 = vld [vmem:[%s1 + $0x290] sm:$0xff]
        %v568 = vld [vmem:[%s1 + $0x298] sm:$0xff]
        %v569 = vld [vmem:[%s1 + $0x2a0] sm:$0xff]
        %v570 = vld [vmem:[%s1 + $0x2a8] sm:$0xff]
        %v571 = vld [vmem:[%s1 + $0x2b0] sm:$0xff]
        %v572 = vld [vmem:[%s1 + $0x2b8] sm:$0xff]
        %v573 = vld [vmem:[%s1 + $0x2c0] sm:$0xff]
        %v574 = vld [vmem:[%s1 + $0x2c8] sm:$0xff]
        %v575 = vld [vmem:[%s1 + $0x2d0] sm:$0xff]
        %v576 = vld [vmem:[%s1 + $0x2d8] sm:$0xff]
        %v577 = vld [vmem:[%s1 + $0x2e0] sm:$0xff]
        %v578 = vld [vmem:[%s1 + $0x2e8] sm:$0xff]
        %v579 = vld [vmem:[%s1 + $0x2f0] sm:$0xff]
        %v580 = vld [vmem:[%s1 + $0x2f8] sm:$0xff]
        %v581 = vld [vmem:[%s1 + $0x300] sm:$0xff]
        %v582 = vld [vmem:[%s1 + $0x308] sm:$0xff]
        %v583 = vld [vmem:[#allocation6] sm:$0x1]
        %v585 = vlaneseq
        %v586 = vshrl.u32 %v585, 7
        %v587 = vsub.s32 0, %v586
        %v588 = vrot.slane %v583, %v587
        %vm590 = vcmask 130048
        %v592 = vsel %vm590, %v379, 0
        %v595 = vsel %vm590, %v386, 0
        %v598 = vsel %vm590, %v393, 0
        %v601 = vsel %vm590, %v400, 0
        %v604 = vsel %vm590, %v407, 0
        %v607 = vsel %vm590, %v414, 0
        %v610 = vsel %vm590, %v421, 0
        %v613 = vsel %vm590, %v428, 0
        %v616 = vsel %vm590, %v435, 0
        %v619 = vsel %vm590, %v442, 0
        %v622 = vsel %vm590, %v449, 0
        %v625 = vsel %vm590, %v456, 0
        %v628 = vsel %vm590, %v463, 0
        %v631 = vsel %vm590, %v470, 0
        %v634 = vsel %vm590, %v477, 0
        %v637 = vsel %vm590, %v484, 0
        %639 = vmatprep.subr.mxu0 0.0
        %640 = vmatpush1.msra.mxu0 %v485
        %641 = vmatprep.subr.mxu0 0.0
        %642 = vmatpush1.msra.mxu0 %v486
        %643 = vmatprep.subr.mxu0 0.0
        %644 = vmatpush1.msra.mxu0 %v487
        %645 = vmatprep.subr.mxu0 0.0
        %646 = vmatpush1.msra.mxu0 %v488
        %647 = vmatprep.subr.mxu0 0.0
        %648 = vmatpush1.msra.mxu0 %v489
        %649 = vmatprep.subr.mxu0 0.0
        %650 = vmatpush1.msra.mxu0 %v490
        %651 = vmatprep.subr.mxu0 0.0
        %652 = vmatpush1.msra.mxu0 %v491
        %653 = vmatprep.subr.mxu0 0.0
        %654 = vmatpush1.msra.mxu0 %v492
        %655 = vmatprep.subr.mxu0 0.0
        %656 = vmatpush1.msra.mxu0 %v493
        %657 = vmatprep.subr.mxu0 0.0
        %658 = vmatpush1.msra.mxu0 %v494
        %659 = vmatprep.subr.mxu0 0.0
        %660 = vmatpush1.msra.mxu0 %v495
        %661 = vmatprep.subr.mxu0 0.0
        %662 = vmatpush1.msra.mxu0 %v496
        %663 = vmatprep.subr.mxu0 0.0
        %664 = vmatpush1.msra.mxu0 %v497
        %665 = vmatprep.subr.mxu0 0.0
        %666 = vmatpush1.msra.mxu0 %v498
        %667 = vmatprep.subr.mxu0 0.0
        %668 = vmatpush1.msra.mxu0 %v499
        %669 = vmatprep.subr.mxu0 0.0
        %670 = vmatpush1.msra.mxu0 %v500
        %671 = vmatprep.subr.mxu0 0.0
        %672 = vmatpush1.msra.mxu0 %v501
        %673 = vmatprep.subr.mxu0 0.0
        %674 = vmatpush1.msra.mxu0 %v502
        %675 = vmatprep.subr.mxu0 0.0
        %676 = vmatpush1.msra.mxu0 %v503
        %677 = vmatprep.subr.mxu0 0.0
        %678 = vmatpush1.msra.mxu0 %v504
        %679 = vmatprep.subr.mxu0 0.0
        %680 = vmatpush1.msra.mxu0 %v505
        %681 = vmatprep.subr.mxu0 0.0
        %682 = vmatpush1.msra.mxu0 %v506
        %683 = vmatprep.subr.mxu0 0.0
        %684 = vmatpush1.msra.mxu0 %v507
        %685 = vmatprep.subr.mxu0 0.0
        %686 = vmatpush1.msra.mxu0 %v508
        %687 = vmatprep.subr.mxu0 0.0
        %688 = vmatpush1.msra.mxu0 %v509
        %689 = vmatprep.subr.mxu0 0.0
        %690 = vmatpush1.msra.mxu0 %v510
        %691 = vmatprep.subr.mxu0 0.0
        %692 = vmatpush1.msra.mxu0 %v511
        %693 = vmatprep.subr.mxu0 0.0
        %694 = vmatpush1.msra.mxu0 %v512
        %695 = vmatprep.subr.mxu0 0.0
        %696 = vmatpush1.msra.mxu0 %v513
        %697 = vmatprep.subr.mxu0 0.0
        %698 = vmatpush1.msra.mxu0 %v514
        %699 = vmatprep.subr.mxu0 0.0
        %700 = vmatpush1.msra.mxu0 %v515
        %701 = vmatprep.subr.mxu0 0.0
        %702 = vmatpush1.msra.mxu0 %v516
        %703 = vmatprep.mubr.f32.mxu0 %v374
        %704 = vmatmul.mubr.f32.gmra.mrb[0].mxu0 %v373
        %v705 = vpop.f32.mrb[0].mxu0
        %v706 = vadd.f32 %v588, %v705
        %v707 = vpop.f32.mrb[0].mxu0
        %708 = vmatprep.mubr.f32.mxu0 %v381
        %709 = vmatmul.mubr.f32.gmra.mrb[0].mxu0 %v380
        %v710 = vpop.f32.mrb[0].mxu0
        %v711 = vadd.f32 %v588, %v710
        %v712 = vpop.f32.mrb[0].mxu0
        %713 = vmatprep.mubr.f32.mxu0 %v388
        %714 = vmatmul.mubr.f32.gmra.mrb[0].mxu0 %v387
        %v715 = vpop.f32.mrb[0].mxu0
        %v716 = vadd.f32 %v588, %v715
        %v717 = vpop.f32.mrb[0].mxu0
        %718 = vmatprep.mubr.f32.mxu0 %v395
        %719 = vmatmul.mubr.f32.gmra.mrb[0].mxu0 %v394
        %v720 = vpop.f32.mrb[0].mxu0
        %v721 = vadd.f32 %v588, %v720
        %v722 = vpop.f32.mrb[0].mxu0
        %723 = vmatprep.mubr.f32.mxu0 %v402
        %724 = vmatmul.mubr.f32.gmra.mrb[0].mxu0 %v401
        %v725 = vpop.f32.mrb[0].mxu0
        %v726 = vadd.f32 %v588, %v725
        %v727 = vpop.f32.mrb[0].mxu0
        %728 = vmatprep.mubr.f32.mxu0 %v409
        %729 = vmatmul.mubr.f32.gmra.mrb[0].mxu0 %v408
        %v730 = vpop.f32.mrb[0].mxu0
        %v731 = vadd.f32 %v588, %v730
        %v732 = vpop.f32.mrb[0].mxu0
        %733 = vmatprep.mubr.f32.mxu0 %v416
        %734 = vmatmul.mubr.f32.gmra.mrb[0].mxu0 %v415
        %v735 = vpop.f32.mrb[0].mxu0
        %v736 = vadd.f32 %v588, %v735
        %v737 = vpop.f32.mrb[0].mxu0
        %738 = vmatprep.mubr.f32.mxu0 %v423
        %739 = vmatmul.mubr.f32.gmra.mrb[0].mxu0 %v422
        %v740 = vpop.f32.mrb[0].mxu0
        %v741 = vadd.f32 %v588, %v740
        %v742 = vpop.f32.mrb[0].mxu0
        %743 = vmatprep.mubr.f32.mxu0 %v430
        %744 = vmatmul.mubr.f32.gmra.mrb[0].mxu0 %v429
        %v745 = vpop.f32.mrb[0].mxu0
        %v746 = vadd.f32 %v588, %v745
        %v747 = vpop.f32.mrb[0].mxu0
        %748 = vmatprep.mubr.f32.mxu0 %v437
        %749 = vmatmul.mubr.f32.gmra.mrb[0].mxu0 %v436
        %v750 = vpop.f32.mrb[0].mxu0
        %v751 = vadd.f32 %v588, %v750
        %v752 = vpop.f32.mrb[0].mxu0
        %753 = vmatprep.mubr.f32.mxu0 %v444
        %754 = vmatmul.mubr.f32.gmra.mrb[0].mxu0 %v443
        %v755 = vpop.f32.mrb[0].mxu0
        %v756 = vadd.f32 %v588, %v755
        %v757 = vpop.f32.mrb[0].mxu0
        %758 = vmatprep.mubr.f32.mxu0 %v451
        %759 = vmatmul.mubr.f32.gmra.mrb[0].mxu0 %v450
        %v760 = vpop.f32.mrb[0].mxu0
        %v761 = vadd.f32 %v588, %v760
        %v762 = vpop.f32.mrb[0].mxu0
        %763 = vmatprep.mubr.f32.mxu0 %v458
        %764 = vmatmul.mubr.f32.gmra.mrb[0].mxu0 %v457
        %v765 = vpop.f32.mrb[0].mxu0
        %v766 = vadd.f32 %v588, %v765
        %v767 = vpop.f32.mrb[0].mxu0
        %768 = vmatprep.mubr.f32.mxu0 %v465
        %769 = vmatmul.mubr.f32.gmra.mrb[0].mxu0 %v464
        %v770 = vpop.f32.mrb[0].mxu0
        %v771 = vadd.f32 %v588, %v770
        %v772 = vpop.f32.mrb[0].mxu0
        %773 = vmatprep.mubr.f32.mxu0 %v472
        %774 = vmatmul.mubr.f32.gmra.mrb[0].mxu0 %v471
        %v775 = vpop.f32.mrb[0].mxu0
        %v776 = vadd.f32 %v588, %v775
        %v777 = vpop.f32.mrb[0].mxu0
        %778 = vmatprep.mubr.f32.mxu0 %v479
        %779 = vmatmul.mubr.f32.gmra.mrb[0].mxu0 %v478
        %v780 = vpop.f32.mrb[0].mxu0
        %v781 = vadd.f32 %v588, %v780
        %v782 = vpop.f32.mrb[0].mxu0
        %783 = vdwg.mxu0
        %784 = vmatprep.subr.mxu0 0.0
        %785 = vmatpush1.msra.mxu0 %v517
        %786 = vmatprep.subr.mxu0 0.0
        %787 = vmatpush1.msra.mxu0 %v518
        %788 = vmatprep.subr.mxu0 0.0
        %789 = vmatpush1.msra.mxu0 %v519
        %790 = vmatprep.subr.mxu0 0.0
        %791 = vmatpush1.msra.mxu0 %v520
        %792 = vmatprep.subr.mxu0 0.0
        %793 = vmatpush1.msra.mxu0 %v521
        %794 = vmatprep.subr.mxu0 0.0
        %795 = vmatpush1.msra.mxu0 %v522
        %796 = vmatprep.subr.mxu0 0.0
        %797 = vmatpush1.msra.mxu0 %v523
        %798 = vmatprep.subr.mxu0 0.0
        %799 = vmatpush1.msra.mxu0 %v524
        %800 = vmatprep.subr.mxu0 0.0
        %801 = vmatpush1.msra.mxu0 %v525
        %802 = vmatprep.subr.mxu0 0.0
        %803 = vmatpush1.msra.mxu0 %v526
        %804 = vmatprep.subr.mxu0 0.0
        %805 = vmatpush1.msra.mxu0 %v527
        %806 = vmatprep.subr.mxu0 0.0
        %807 = vmatpush1.msra.mxu0 %v528
        %808 = vmatprep.subr.mxu0 0.0
        %809 = vmatpush1.msra.mxu0 %v529
        %810 = vmatprep.subr.mxu0 0.0
        %811 = vmatpush1.msra.mxu0 %v530
        %812 = vmatprep.subr.mxu0 0.0
        %813 = vmatpush1.msra.mxu0 %v531
        %814 = vmatprep.subr.mxu0 0.0
        %815 = vmatpush1.msra.mxu0 %v532
        %816 = vmatprep.subr.mxu0 0.0
        %817 = vmatpush1.msra.mxu0 %v533
        %818 = vmatprep.subr.mxu0 0.0
        %819 = vmatpush1.msra.mxu0 %v534
        %820 = vmatprep.subr.mxu0 0.0
        %821 = vmatpush1.msra.mxu0 %v535
        %822 = vmatprep.subr.mxu0 0.0
        %823 = vmatpush1.msra.mxu0 %v536
        %824 = vmatprep.subr.mxu0 0.0
        %825 = vmatpush1.msra.mxu0 %v537
        %826 = vmatprep.subr.mxu0 0.0
        %827 = vmatpush1.msra.mxu0 %v538
        %828 = vmatprep.subr.mxu0 0.0
        %829 = vmatpush1.msra.mxu0 %v539
        %830 = vmatprep.subr.mxu0 0.0
        %831 = vmatpush1.msra.mxu0 %v540
        %832 = vmatprep.subr.mxu0 0.0
        %833 = vmatpush1.msra.mxu0 %v541
        %834 = vmatprep.subr.mxu0 0.0
        %835 = vmatpush1.msra.mxu0 %v542
        %836 = vmatprep.subr.mxu0 0.0
        %837 = vmatpush1.msra.mxu0 %v543
        %838 = vmatprep.subr.mxu0 0.0
        %839 = vmatpush1.msra.mxu0 %v544
        %840 = vmatprep.subr.mxu0 0.0
        %841 = vmatpush1.msra.mxu0 %v545
        %842 = vmatprep.subr.mxu0 0.0
        %843 = vmatpush1.msra.mxu0 %v546
        %844 = vmatprep.subr.mxu0 0.0
        %845 = vmatpush1.msra.mxu0 %v547
        %846 = vmatprep.subr.mxu0 0.0
        %847 = vmatpush1.msra.mxu0 %v548
        %848 = vmatprep.mubr.f32.mxu0 %v376
        %849 = vmatmul.mubr.f32.gmra.mrb[0].mxu0 %v375
        %v850 = vpop.f32.mrb[0].mxu0
        %v851 = vadd.f32 %v706, %v850
        %v852 = vpop.f32.mrb[0].mxu0
        %853 = vmatprep.mubr.f32.mxu0 %v383
        %854 = vmatmul.mubr.f32.gmra.mrb[0].mxu0 %v382
        %v855 = vpop.f32.mrb[0].mxu0
        %v856 = vadd.f32 %v711, %v855
        %v857 = vpop.f32.mrb[0].mxu0
        %858 = vmatprep.mubr.f32.mxu0 %v390
        %859 = vmatmul.mubr.f32.gmra.mrb[0].mxu0 %v389
        %v860 = vpop.f32.mrb[0].mxu0
        %v861 = vadd.f32 %v716, %v860
        %v862 = vpop.f32.mrb[0].mxu0
        %863 = vmatprep.mubr.f32.mxu0 %v397
        %864 = vmatmul.mubr.f32.gmra.mrb[0].mxu0 %v396
        %v865 = vpop.f32.mrb[0].mxu0
        %v866 = vadd.f32 %v721, %v865
        %v867 = vpop.f32.mrb[0].mxu0
        %868 = vmatprep.mubr.f32.mxu0 %v404
        %869 = vmatmul.mubr.f32.gmra.mrb[0].mxu0 %v403
        %v870 = vpop.f32.mrb[0].mxu0
        %v871 = vadd.f32 %v726, %v870
        %v872 = vpop.f32.mrb[0].mxu0
        %873 = vmatprep.mubr.f32.mxu0 %v411
        %874 = vmatmul.mubr.f32.gmra.mrb[0].mxu0 %v410
        %v875 = vpop.f32.mrb[0].mxu0
        %v876 = vadd.f32 %v731, %v875
        %v877 = vpop.f32.mrb[0].mxu0
        %878 = vmatprep.mubr.f32.mxu0 %v418
        %879 = vmatmul.mubr.f32.gmra.mrb[0].mxu0 %v417
        %v880 = vpop.f32.mrb[0].mxu0
        %v881 = vadd.f32 %v736, %v880
        %v882 = vpop.f32.mrb[0].mxu0
        %883 = vmatprep.mubr.f32.mxu0 %v425
        %884 = vmatmul.mubr.f32.gmra.mrb[0].mxu0 %v424
        %v885 = vpop.f32.mrb[0].mxu0
        %v886 = vadd.f32 %v741, %v885
        %v887 = vpop.f32.mrb[0].mxu0
        %888 = vmatprep.mubr.f32.mxu0 %v432
        %889 = vmatmul.mubr.f32.gmra.mrb[0].mxu0 %v431
        %v890 = vpop.f32.mrb[0].mxu0
        %v891 = vadd.f32 %v746, %v890
        %v892 = vpop.f32.mrb[0].mxu0
        %893 = vmatprep.mubr.f32.mxu0 %v439
        %894 = vmatmul.mubr.f32.gmra.mrb[0].mxu0 %v438
        %v895 = vpop.f32.mrb[0].mxu0
        %v896 = vadd.f32 %v751, %v895
        %v897 = vpop.f32.mrb[0].mxu0
        %898 = vmatprep.mubr.f32.mxu0 %v446
        %899 = vmatmul.mubr.f32.gmra.mrb[0].mxu0 %v445
        %v900 = vpop.f32.mrb[0].mxu0
        %v901 = vadd.f32 %v756, %v900
        %v902 = vpop.f32.mrb[0].mxu0
        %903 = vmatprep.mubr.f32.mxu0 %v453
        %904 = vmatmul.mubr.f32.gmra.mrb[0].mxu0 %v452
        %v905 = vpop.f32.mrb[0].mxu0
        %v906 = vadd.f32 %v761, %v905
        %v907 = vpop.f32.mrb[0].mxu0
        %908 = vmatprep.mubr.f32.mxu0 %v460
        %909 = vmatmul.mubr.f32.gmra.mrb[0].mxu0 %v459
        %v910 = vpop.f32.mrb[0].mxu0
        %v911 = vadd.f32 %v766, %v910
        %v912 = vpop.f32.mrb[0].mxu0
        %913 = vmatprep.mubr.f32.mxu0 %v467
        %914 = vmatmul.mubr.f32.gmra.mrb[0].mxu0 %v466
        %v915 = vpop.f32.mrb[0].mxu0
        %v916 = vadd.f32 %v771, %v915
        %v917 = vpop.f32.mrb[0].mxu0
        %918 = vmatprep.mubr.f32.mxu0 %v474
        %919 = vmatmul.mubr.f32.gmra.mrb[0].mxu0 %v473
        %v920 = vpop.f32.mrb[0].mxu0
        %v921 = vadd.f32 %v776, %v920
        %v922 = vpop.f32.mrb[0].mxu0
        %923 = vmatprep.mubr.f32.mxu0 %v481
        %924 = vmatmul.mubr.f32.gmra.mrb[0].mxu0 %v480
        %v925 = vpop.f32.mrb[0].mxu0
        %v926 = vadd.f32 %v781, %v925
        %v927 = vpop.f32.mrb[0].mxu0
        %928 = vdwg.mxu0
        %929 = vmatprep.subr.mxu0 0.0
        %930 = vmatpush1.msra.mxu0 %v549
        %931 = vmatprep.subr.mxu0 0.0
        %932 = vmatpush1.msra.mxu0 %v550
        %933 = vmatprep.subr.mxu0 0.0
        %934 = vmatpush1.msra.mxu0 %v551
        %935 = vmatprep.subr.mxu0 0.0
        %936 = vmatpush1.msra.mxu0 %v552
        %937 = vmatprep.subr.mxu0 0.0
        %938 = vmatpush1.msra.mxu0 %v553
        %939 = vmatprep.subr.mxu0 0.0
        %940 = vmatpush1.msra.mxu0 %v554
        %941 = vmatprep.subr.mxu0 0.0
        %942 = vmatpush1.msra.mxu0 %v555
        %943 = vmatprep.subr.mxu0 0.0
        %944 = vmatpush1.msra.mxu0 %v556
        %945 = vmatprep.subr.mxu0 0.0
        %946 = vmatpush1.msra.mxu0 %v557
        %947 = vmatprep.subr.mxu0 0.0
        %948 = vmatpush1.msra.mxu0 %v558
        %949 = vmatprep.subr.mxu0 0.0
        %950 = vmatpush1.msra.mxu0 %v559
        %951 = vmatprep.subr.mxu0 0.0
        %952 = vmatpush1.msra.mxu0 %v560
        %953 = vmatprep.subr.mxu0 0.0
        %954 = vmatpush1.msra.mxu0 %v561
        %955 = vmatprep.subr.mxu0 0.0
        %956 = vmatpush1.msra.mxu0 %v562
        %957 = vmatprep.subr.mxu0 0.0
        %958 = vmatpush1.msra.mxu0 %v563
        %959 = vmatprep.subr.mxu0 0.0
        %960 = vmatpush1.msra.mxu0 %v564
        %961 = vmatprep.subr.mxu0 0.0
        %962 = vmatpush1.msra.mxu0 %v565
        %963 = vmatprep.subr.mxu0 0.0
        %964 = vmatpush1.msra.mxu0 %v566
        %965 = vmatprep.subr.mxu0 0.0
        %966 = vmatpush1.msra.mxu0 %v567
        %967 = vmatprep.subr.mxu0 0.0
        %968 = vmatpush1.msra.mxu0 %v568
        %969 = vmatprep.subr.mxu0 0.0
        %970 = vmatpush1.msra.mxu0 %v569
        %971 = vmatprep.subr.mxu0 0.0
        %972 = vmatpush1.msra.mxu0 %v570
        %973 = vmatprep.subr.mxu0 0.0
        %974 = vmatpush1.msra.mxu0 %v571
        %975 = vmatprep.subr.mxu0 0.0
        %976 = vmatpush1.msra.mxu0 %v572
        %977 = vmatprep.subr.mxu0 0.0
        %978 = vmatpush1.msra.mxu0 %v573
        %979 = vmatprep.subr.mxu0 0.0
        %980 = vmatpush1.msra.mxu0 %v574
        %981 = vmatprep.subr.mxu0 0.0
        %982 = vmatpush1.msra.mxu0 %v575
        %983 = vmatprep.subr.mxu0 0.0
        %984 = vmatpush1.msra.mxu0 %v576
        %985 = vmatprep.subr.mxu0 0.0
        %986 = vmatpush1.msra.mxu0 %v577
        %987 = vmatprep.subr.mxu0 0.0
        %988 = vmatpush1.msra.mxu0 %v578
        %989 = vmatprep.subr.mxu0 0.0
        %990 = vmatpush1.msra.mxu0 %v579
        %991 = vmatprep.subr.mxu0 0.0
        %992 = vmatpush1.msra.mxu0 %v580
        %993 = vmatprep.mubr.f32.mxu0 %v378
        %994 = vmatmul.mubr.f32.gmra.mrb[0].mxu0 %v377
        %v995 = vpop.f32.mrb[0].mxu0
        %v996 = vadd.f32 %v851, %v995
        %v997 = vpop.f32.mrb[0].mxu0
        %998 = vmatprep.mubr.f32.mxu0 %v385
        %999 = vmatmul.mubr.f32.gmra.mrb[0].mxu0 %v384
        %v1000 = vpop.f32.mrb[0].mxu0
        %v1001 = vadd.f32 %v856, %v1000
        %v1002 = vpop.f32.mrb[0].mxu0
        %1003 = vmatprep.mubr.f32.mxu0 %v392
        %1004 = vmatmul.mubr.f32.gmra.mrb[0].mxu0 %v391
        %v1005 = vpop.f32.mrb[0].mxu0
        %v1006 = vadd.f32 %v861, %v1005
        %v1007 = vpop.f32.mrb[0].mxu0
        %1008 = vmatprep.mubr.f32.mxu0 %v399
        %1009 = vmatmul.mubr.f32.gmra.mrb[0].mxu0 %v398
        %v1010 = vpop.f32.mrb[0].mxu0
        %v1011 = vadd.f32 %v866, %v1010
        %v1012 = vpop.f32.mrb[0].mxu0
        %1013 = vmatprep.mubr.f32.mxu0 %v406
        %1014 = vmatmul.mubr.f32.gmra.mrb[0].mxu0 %v405
        %v1015 = vpop.f32.mrb[0].mxu0
        %v1016 = vadd.f32 %v871, %v1015
        %v1017 = vpop.f32.mrb[0].mxu0
        %1018 = vmatprep.mubr.f32.mxu0 %v413
        %1019 = vmatmul.mubr.f32.gmra.mrb[0].mxu0 %v412
        %v1020 = vpop.f32.mrb[0].mxu0
        %v1021 = vadd.f32 %v876, %v1020
        %v1022 = vpop.f32.mrb[0].mxu0
        %1023 = vmatprep.mubr.f32.mxu0 %v420
        %1024 = vmatmul.mubr.f32.gmra.mrb[0].mxu0 %v419
        %v1025 = vpop.f32.mrb[0].mxu0
        %v1026 = vadd.f32 %v881, %v1025
        %v1027 = vpop.f32.mrb[0].mxu0
        %1028 = vmatprep.mubr.f32.mxu0 %v427
        %1029 = vmatmul.mubr.f32.gmra.mrb[0].mxu0 %v426
        %v1030 = vpop.f32.mrb[0].mxu0
        %v1031 = vadd.f32 %v886, %v1030
        %v1032 = vpop.f32.mrb[0].mxu0
        %1033 = vmatprep.mubr.f32.mxu0 %v434
        %1034 = vmatmul.mubr.f32.gmra.mrb[0].mxu0 %v433
        %v1035 = vpop.f32.mrb[0].mxu0
        %v1036 = vadd.f32 %v891, %v1035
        %v1037 = vpop.f32.mrb[0].mxu0
        %1038 = vmatprep.mubr.f32.mxu0 %v441
        %1039 = vmatmul.mubr.f32.gmra.mrb[0].mxu0 %v440
        %v1040 = vpop.f32.mrb[0].mxu0
        %v1041 = vadd.f32 %v896, %v1040
        %v1042 = vpop.f32.mrb[0].mxu0
        %1043 = vmatprep.mubr.f32.mxu0 %v448
        %1044 = vmatmul.mubr.f32.gmra.mrb[0].mxu0 %v447
        %v1045 = vpop.f32.mrb[0].mxu0
        %v1046 = vadd.f32 %v901, %v1045
        %v1047 = vpop.f32.mrb[0].mxu0
        %1048 = vmatprep.mubr.f32.mxu0 %v455
        %1049 = vmatmul.mubr.f32.gmra.mrb[0].mxu0 %v454
        %v1050 = vpop.f32.mrb[0].mxu0
        %v1051 = vadd.f32 %v906, %v1050
        %v1052 = vpop.f32.mrb[0].mxu0
        %1053 = vmatprep.mubr.f32.mxu0 %v462
        %1054 = vmatmul.mubr.f32.gmra.mrb[0].mxu0 %v461
        %v1055 = vpop.f32.mrb[0].mxu0
        %v1056 = vadd.f32 %v911, %v1055
        %v1057 = vpop.f32.mrb[0].mxu0
        %1058 = vmatprep.mubr.f32.mxu0 %v469
        %1059 = vmatmul.mubr.f32.gmra.mrb[0].mxu0 %v468
        %v1060 = vpop.f32.mrb[0].mxu0
        %v1061 = vadd.f32 %v916, %v1060
        %v1062 = vpop.f32.mrb[0].mxu0
        %1063 = vmatprep.mubr.f32.mxu0 %v476
        %1064 = vmatmul.mubr.f32.gmra.mrb[0].mxu0 %v475
        %v1065 = vpop.f32.mrb[0].mxu0
        %v1066 = vadd.f32 %v921, %v1065
        %v1067 = vpop.f32.mrb[0].mxu0
        %1068 = vmatprep.mubr.f32.mxu0 %v483
        %1069 = vmatmul.mubr.f32.gmra.mrb[0].mxu0 %v482
        %v1070 = vpop.f32.mrb[0].mxu0
        %v1071 = vadd.f32 %v926, %v1070
        %v1072 = vpop.f32.mrb[0].mxu0
        %1073 = vdwg.mxu0
        %1074 = vmatprep.subr.mxu0 0.0
        %1075 = vmatpush1.msra.mxu0 %v581
        %1076 = vmatprep.subr.mxu0 0.0
        %1077 = vmatpush1.msra.mxu0 %v582
        %1078 = vmatprep.subr.mxu0 0.0
        %1079 = vmatpush1.msra.mxu0 0.0
        %1080 = vmatprep.subr.mxu0 0.0
        %1081 = vmatpush1.msra.mxu0 0.0
        %1082 = vmatprep.subr.mxu0 0.0
        %1083 = vmatpush1.msra.mxu0 0.0
        %1084 = vmatprep.subr.mxu0 0.0
        %1085 = vmatpush1.msra.mxu0 0.0
        %1086 = vmatprep.subr.mxu0 0.0
        %1087 = vmatpush1.msra.mxu0 0.0
        %1088 = vmatprep.subr.mxu0 0.0
        %1089 = vmatpush1.msra.mxu0 0.0
        %1090 = vmatprep.subr.mxu0 0.0
        %1091 = vmatpush1.msra.mxu0 0.0
        %1092 = vmatprep.subr.mxu0 0.0
        %1093 = vmatpush1.msra.mxu0 0.0
        %1094 = vmatprep.subr.mxu0 0.0
        %1095 = vmatpush1.msra.mxu0 0.0
        %1096 = vmatprep.subr.mxu0 0.0
        %1097 = vmatpush1.msra.mxu0 0.0
        %1098 = vmatprep.subr.mxu0 0.0
        %1099 = vmatpush1.msra.mxu0 0.0
        %1100 = vmatprep.subr.mxu0 0.0
        %1101 = vmatpush1.msra.mxu0 0.0
        %1102 = vmatprep.subr.mxu0 0.0
        %1103 = vmatpush1.msra.mxu0 0.0
        %1104 = vmatprep.subr.mxu0 0.0
        %1105 = vmatpush1.msra.mxu0 0.0
        %1106 = vmatprep.subr.mxu0 0.0
        %1107 = vmatpush1.msra.mxu0 0.0
        %1108 = vmatprep.subr.mxu0 0.0
        %1109 = vmatpush1.msra.mxu0 0.0
        %1110 = vmatprep.subr.mxu0 0.0
        %1111 = vmatpush1.msra.mxu0 0.0
        %1112 = vmatprep.subr.mxu0 0.0
        %1113 = vmatpush1.msra.mxu0 0.0
        %1114 = vmatprep.subr.mxu0 0.0
        %1115 = vmatpush1.msra.mxu0 0.0
        %1116 = vmatprep.subr.mxu0 0.0
        %1117 = vmatpush1.msra.mxu0 0.0
        %1118 = vmatprep.subr.mxu0 0.0
        %1119 = vmatpush1.msra.mxu0 0.0
        %1120 = vmatprep.subr.mxu0 0.0
        %1121 = vmatpush1.msra.mxu0 0.0
        %1122 = vmatprep.subr.mxu0 0.0
        %1123 = vmatpush1.msra.mxu0 0.0
        %1124 = vmatprep.subr.mxu0 0.0
        %1125 = vmatpush1.msra.mxu0 0.0
        %1126 = vmatprep.subr.mxu0 0.0
        %1127 = vmatpush1.msra.mxu0 0.0
        %1128 = vmatprep.subr.mxu0 0.0
        %1129 = vmatpush1.msra.mxu0 0.0
        %1130 = vmatprep.subr.mxu0 0.0
        %1131 = vmatpush1.msra.mxu0 0.0
        %1132 = vmatprep.subr.mxu0 0.0
        %1133 = vmatpush1.msra.mxu0 0.0
        %1134 = vmatprep.subr.mxu0 0.0
        %1135 = vmatpush1.msra.mxu0 0.0
        %1136 = vmatprep.subr.mxu0 0.0
        %1137 = vmatpush1.msra.mxu0 0.0
        %1138 = vmatprep.mubr.f32.mxu0 0.0
        %1139 = vmatmul.mubr.f32.gmra.mrb[0].mxu0 %v592
        %v1140 = vpop.f32.mrb[0].mxu0
        %v1141 = vadd.f32 %v996, %v1140
        %v1142 = vpop.f32.mrb[0].mxu0
        %1143 = vmatprep.mubr.f32.mxu0 0.0
        %1144 = vmatmul.mubr.f32.gmra.mrb[0].mxu0 %v595
        %v1145 = vpop.f32.mrb[0].mxu0
        %v1146 = vadd.f32 %v1001, %v1145
        %v1147 = vpop.f32.mrb[0].mxu0
        %1148 = vmatprep.mubr.f32.mxu0 0.0
        %1149 = vmatmul.mubr.f32.gmra.mrb[0].mxu0 %v598
        %v1150 = vpop.f32.mrb[0].mxu0
        %v1151 = vadd.f32 %v1006, %v1150
        %v1152 = vpop.f32.mrb[0].mxu0
        %1153 = vmatprep.mubr.f32.mxu0 0.0
        %1154 = vmatmul.mubr.f32.gmra.mrb[0].mxu0 %v601
        %v1155 = vpop.f32.mrb[0].mxu0
        %v1156 = vadd.f32 %v1011, %v1155
        %v1157 = vpop.f32.mrb[0].mxu0
        %1158 = vmatprep.mubr.f32.mxu0 0.0
        %1159 = vmatmul.mubr.f32.gmra.mrb[0].mxu0 %v604
        %v1160 = vpop.f32.mrb[0].mxu0
        %v1161 = vadd.f32 %v1016, %v1160
        %v1162 = vpop.f32.mrb[0].mxu0
        %1163 = vmatprep.mubr.f32.mxu0 0.0
        %1164 = vmatmul.mubr.f32.gmra.mrb[0].mxu0 %v607
        %v1165 = vpop.f32.mrb[0].mxu0
        %v1166 = vadd.f32 %v1021, %v1165
        %v1167 = vpop.f32.mrb[0].mxu0
        %1168 = vmatprep.mubr.f32.mxu0 0.0
        %1169 = vmatmul.mubr.f32.gmra.mrb[0].mxu0 %v610
        %v1170 = vpop.f32.mrb[0].mxu0
        %v1171 = vadd.f32 %v1026, %v1170
        %v1172 = vpop.f32.mrb[0].mxu0
        %1173 = vmatprep.mubr.f32.mxu0 0.0
        %1174 = vmatmul.mubr.f32.gmra.mrb[0].mxu0 %v613
        %v1175 = vpop.f32.mrb[0].mxu0
        %v1176 = vadd.f32 %v1031, %v1175
        %v1177 = vpop.f32.mrb[0].mxu0
        %1178 = vmatprep.mubr.f32.mxu0 0.0
        %1179 = vmatmul.mubr.f32.gmra.mrb[0].mxu0 %v616
        %v1180 = vpop.f32.mrb[0].mxu0
        %v1181 = vadd.f32 %v1036, %v1180
        %v1182 = vpop.f32.mrb[0].mxu0
        %1183 = vmatprep.mubr.f32.mxu0 0.0
        %1184 = vmatmul.mubr.f32.gmra.mrb[0].mxu0 %v619
        %v1185 = vpop.f32.mrb[0].mxu0
        %v1186 = vadd.f32 %v1041, %v1185
        %v1187 = vpop.f32.mrb[0].mxu0
        %1188 = vmatprep.mubr.f32.mxu0 0.0
        %1189 = vmatmul.mubr.f32.gmra.mrb[0].mxu0 %v622
        %v1190 = vpop.f32.mrb[0].mxu0
        %v1191 = vadd.f32 %v1046, %v1190
        %v1192 = vpop.f32.mrb[0].mxu0
        %1193 = vmatprep.mubr.f32.mxu0 0.0
        %1194 = vmatmul.mubr.f32.gmra.mrb[0].mxu0 %v625
        %v1195 = vpop.f32.mrb[0].mxu0
        %v1196 = vadd.f32 %v1051, %v1195
        %v1197 = vpop.f32.mrb[0].mxu0
        %1198 = vmatprep.mubr.f32.mxu0 0.0
        %1199 = vmatmul.mubr.f32.gmra.mrb[0].mxu0 %v628
        %v1200 = vpop.f32.mrb[0].mxu0
        %v1201 = vadd.f32 %v1056, %v1200
        %v1202 = vpop.f32.mrb[0].mxu0
        %1203 = vmatprep.mubr.f32.mxu0 0.0
        %1204 = vmatmul.mubr.f32.gmra.mrb[0].mxu0 %v631
        %v1205 = vpop.f32.mrb[0].mxu0
        %v1206 = vadd.f32 %v1061, %v1205
        %v1207 = vpop.f32.mrb[0].mxu0
        %1208 = vmatprep.mubr.f32.mxu0 0.0
        %1209 = vmatmul.mubr.f32.gmra.mrb[0].mxu0 %v634
        %v1210 = vpop.f32.mrb[0].mxu0
        %v1211 = vadd.f32 %v1066, %v1210
        %v1212 = vpop.f32.mrb[0].mxu0
        %1213 = vmatprep.mubr.f32.mxu0 0.0
        %1214 = vmatmul.mubr.f32.gmra.mrb[0].mxu0 %v637
        %v1215 = vpop.f32.mrb[0].mxu0
        %v1216 = vadd.f32 %v1071, %v1215
        %v1217 = vpop.f32.mrb[0].mxu0
        %1218 = vdwg.mxu0
        %v1219 = vmax.f32 %v1141, 0.0
        %v1220 = vmax.f32 %v1146, 0.0
        %v1221 = vmax.f32 %v1151, 0.0
        %v1222 = vmax.f32 %v1156, 0.0
        %v1223 = vmax.f32 %v1161, 0.0
        %v1224 = vmax.f32 %v1166, 0.0
        %v1225 = vmax.f32 %v1171, 0.0
        %v1226 = vmax.f32 %v1176, 0.0
        %v1227 = vmax.f32 %v1181, 0.0
        %v1228 = vmax.f32 %v1186, 0.0
        %v1229 = vmax.f32 %v1191, 0.0
        %v1230 = vmax.f32 %v1196, 0.0
        %v1231 = vmax.f32 %v1201, 0.0
        %v1232 = vmax.f32 %v1206, 0.0
        %v1233 = vmax.f32 %v1211, 0.0
        %v1234 = vmax.f32 %v1216, 0.0
        %s1235 = sadd.s32 %s372, 128
        %p1236 = scmp.le.s32.totalorder %s1235, 300
        // Predicated region
        $region77: #{tpu_custom_call.1} parent=47 // pred_check
          %p1237 = pneg %p1236
        $region78: #{tpu_custom_call.1} parent=47 // pred_check_branch
          %1239 = sbr.rel (%p1237) target = $region80
        $region79: #{tpu_custom_call.1} parent=47 // pred_region
          %v1240 = vld [vmem:[#allocation2] sm:$0x1]
          %vm1241 = vcmask 203776
          %v1242 = vsel %vm1241, %v1219, 0.0
          %v1243 = vsel %vm1241, %v1220, 0.0
          %v1244 = vadd.f32 %v1242, %v1243
          %v1245 = vsel %vm1241, %v1221, 0.0
          %v1246 = vadd.f32 %v1244, %v1245
          %v1247 = vsel %vm1241, %v1222, 0.0
          %v1248 = vadd.f32 %v1246, %v1247
          %v1249 = vsel %vm1241, %v1223, 0.0
          %v1250 = vadd.f32 %v1248, %v1249
          %v1251 = vsel %vm1241, %v1224, 0.0
          %v1252 = vadd.f32 %v1250, %v1251
          %v1253 = vsel %vm1241, %v1225, 0.0
          %v1254 = vadd.f32 %v1252, %v1253
          %v1255 = vsel %vm1241, %v1226, 0.0
          %v1256 = vadd.f32 %v1254, %v1255
          %v1257 = vsel %vm1241, %v1227, 0.0
          %v1258 = vadd.f32 %v1256, %v1257
          %v1259 = vsel %vm1241, %v1228, 0.0
          %v1260 = vadd.f32 %v1258, %v1259
          %v1261 = vsel %vm1241, %v1229, 0.0
          %v1262 = vadd.f32 %v1260, %v1261
          %v1263 = vsel %vm1241, %v1230, 0.0
          %v1264 = vadd.f32 %v1262, %v1263
          %v1265 = vsel %vm1241, %v1231, 0.0
          %v1266 = vadd.f32 %v1264, %v1265
          %v1267 = vsel %vm1241, %v1232, 0.0
          %v1268 = vadd.f32 %v1266, %v1267
          %v1269 = vsel %vm1241, %v1233, 0.0
          %v1270 = vadd.f32 %v1268, %v1269
          %v1271 = vsel %vm1241, %v1234, 0.0
          %v1272 = vadd.f32 %v1270, %v1271
          %v1273 = vrot.slane %v1272, 4
          %v1274 = vadd.f32 %v1272, %v1273
          %v1275 = vrot.slane %v1274, 2
          %v1276 = vadd.f32 %v1274, %v1275
          %v1277 = vrot.slane %v1276, 1
          %v1278 = vadd.f32 %v1276, %v1277
          %v1279 = vadd.f32 %v1240, %v1278
          %vm1280 = vcmask 196608
          %1281 = vst.msk [vmem:[#allocation2] sm:$0x1] %vm1280, %v1279
        $region80: #{tpu_custom_call.1} parent=47 // pred_fallthru
          _
        %p1282 = scmp.gt.s32.totalorder %s1235, 300
        // Predicated region
        $region81: #{tpu_custom_call.1} parent=47 // pred_check
          %p1283 = pneg %p1282
        $region82: #{tpu_custom_call.1} parent=47 // pred_check_branch
          %1285 = sbr.rel (%p1283) target = $region84
        $region83: #{tpu_custom_call.1} parent=47 // pred_region
          %v1286 = vlaneseq
          %v1287 = vshrl.u32 %v1286, 7
          %v1288 = vadd.s32 %v1287, 8
          %v1289 = vadd.s32 %v1287, 16
          %v1290 = vadd.s32 %v1287, 24
          %v1291 = vadd.s32 %v1287, 32
          %v1292 = vadd.s32 %v1287, 40
          %v1293 = vadd.s32 %v1287, 48
          %v1294 = vadd.s32 %v1287, 56
          %v1295 = vadd.s32 %v1287, 64
          %v1296 = vadd.s32 %v1287, 72
          %v1297 = vadd.s32 %v1287, 80
          %v1298 = vadd.s32 %v1287, 88
          %v1299 = vadd.s32 %v1287, 96
          %v1300 = vadd.s32 %v1287, 104
          %v1301 = vadd.s32 %v1287, 112
          %v1302 = vadd.s32 %v1287, 120
          %v1303 = vstv %s372
          %v1304 = vadd.s32 %v1287, %v1303
          %v1305 = vadd.s32 %v1288, %v1303
          %v1306 = vadd.s32 %v1289, %v1303
          %v1307 = vadd.s32 %v1290, %v1303
          %v1308 = vadd.s32 %v1291, %v1303
          %v1309 = vadd.s32 %v1292, %v1303
          %v1310 = vadd.s32 %v1293, %v1303
          %v1311 = vadd.s32 %v1294, %v1303
          %v1312 = vadd.s32 %v1295, %v1303
          %v1313 = vadd.s32 %v1296, %v1303
          %v1314 = vadd.s32 %v1297, %v1303
          %v1315 = vadd.s32 %v1298, %v1303
          %v1316 = vadd.s32 %v1299, %v1303
          %v1317 = vadd.s32 %v1300, %v1303
          %v1318 = vadd.s32 %v1301, %v1303
          %v1319 = vadd.s32 %v1302, %v1303
          %v1320 = vld [vmem:[#allocation2] sm:$0x1]
          %vm1321 = vcmp.lt.s32.totalorder %v1304, 300
          %vm1322 = vcmp.lt.s32.totalorder %v1305, 300
          %vm1323 = vcmp.lt.s32.totalorder %v1306, 300
          %vm1324 = vcmp.lt.s32.totalorder %v1307, 300
          %vm1325 = vcmp.lt.s32.totalorder %v1308, 300
          %vm1326 = vcmp.lt.s32.totalorder %v1309, 300
          %vm1327 = vcmp.lt.s32.totalorder %v1310, 300
          %vm1328 = vcmp.lt.s32.totalorder %v1311, 300
          %vm1329 = vcmp.lt.s32.totalorder %v1312, 300
          %vm1330 = vcmp.lt.s32.totalorder %v1313, 300
          %vm1331 = vcmp.lt.s32.totalorder %v1314, 300
          %vm1332 = vcmp.lt.s32.totalorder %v1315, 300
          %vm1333 = vcmp.lt.s32.totalorder %v1316, 300
          %vm1334 = vcmp.lt.s32.totalorder %v1317, 300
          %vm1335 = vcmp.lt.s32.totalorder %v1318, 300
          %vm1336 = vcmp.lt.s32.totalorder %v1319, 300
          %v1337 = vsel %vm1321, 1, 0
          %v1338 = vsel %vm1322, 1, 0
          %v1339 = vsel %vm1323, 1, 0
          %v1340 = vsel %vm1324, 1, 0
          %v1341 = vsel %vm1325, 1, 0
          %v1342 = vsel %vm1326, 1, 0
          %v1343 = vsel %vm1327, 1, 0
          %v1344 = vsel %vm1328, 1, 0
          %v1345 = vsel %vm1329, 1, 0
          %v1346 = vsel %vm1330, 1, 0
          %v1347 = vsel %vm1331, 1, 0
          %v1348 = vsel %vm1332, 1, 0
          %v1349 = vsel %vm1333, 1, 0
          %v1350 = vsel %vm1334, 1, 0
          %v1351 = vsel %vm1335, 1, 0
          %v1352 = vsel %vm1336, 1, 0
          %vm1353 = vcmp.eq.s32.totalorder %v1337, 1
          %vm1354 = vcmp.eq.s32.totalorder %v1338, 1
          %vm1355 = vcmp.eq.s32.totalorder %v1339, 1
          %vm1356 = vcmp.eq.s32.totalorder %v1340, 1
          %vm1357 = vcmp.eq.s32.totalorder %v1341, 1
          %vm1358 = vcmp.eq.s32.totalorder %v1342, 1
          %vm1359 = vcmp.eq.s32.totalorder %v1343, 1
          %vm1360 = vcmp.eq.s32.totalorder %v1344, 1
          %vm1361 = vcmp.eq.s32.totalorder %v1345, 1
          %vm1362 = vcmp.eq.s32.totalorder %v1346, 1
          %vm1363 = vcmp.eq.s32.totalorder %v1347, 1
          %vm1364 = vcmp.eq.s32.totalorder %v1348, 1
          %vm1365 = vcmp.eq.s32.totalorder %v1349, 1
          %vm1366 = vcmp.eq.s32.totalorder %v1350, 1
          %vm1367 = vcmp.eq.s32.totalorder %v1351, 1
          %vm1368 = vcmp.eq.s32.totalorder %v1352, 1
          %v1369 = vsel %vm1353, %v1219, 0.0
          %v1370 = vsel %vm1354, %v1220, 0.0
          %v1371 = vsel %vm1355, %v1221, 0.0
          %v1372 = vsel %vm1356, %v1222, 0.0
          %v1373 = vsel %vm1357, %v1223, 0.0
          %v1374 = vsel %vm1358, %v1224, 0.0
          %v1375 = vsel %vm1359, %v1225, 0.0
          %v1376 = vsel %vm1360, %v1226, 0.0
          %v1377 = vsel %vm1361, %v1227, 0.0
          %v1378 = vsel %vm1362, %v1228, 0.0
          %v1379 = vsel %vm1363, %v1229, 0.0
          %v1380 = vsel %vm1364, %v1230, 0.0
          %v1381 = vsel %vm1365, %v1231, 0.0
          %v1382 = vsel %vm1366, %v1232, 0.0
          %v1383 = vsel %vm1367, %v1233, 0.0
          %v1384 = vsel %vm1368, %v1234, 0.0
          %vm1385 = vcmask 203776
          %v1386 = vsel %vm1385, %v1369, 0.0
          %v1387 = vsel %vm1385, %v1370, 0.0
          %v1388 = vadd.f32 %v1386, %v1387
          %v1389 = vsel %vm1385, %v1371, 0.0
          %v1390 = vadd.f32 %v1388, %v1389
          %v1391 = vsel %vm1385, %v1372, 0.0
          %v1392 = vadd.f32 %v1390, %v1391
          %v1393 = vsel %vm1385, %v1373, 0.0
          %v1394 = vadd.f32 %v1392, %v1393
          %v1395 = vsel %vm1385, %v1374, 0.0
          %v1396 = vadd.f32 %v1394, %v1395
          %v1397 = vsel %vm1385, %v1375, 0.0
          %v1398 = vadd.f32 %v1396, %v1397
          %v1399 = vsel %vm1385, %v1376, 0.0
          %v1400 = vadd.f32 %v1398, %v1399
          %v1401 = vsel %vm1385, %v1377, 0.0
          %v1402 = vadd.f32 %v1400, %v1401
          %v1403 = vsel %vm1385, %v1378, 0.0
          %v1404 = vadd.f32 %v1402, %v1403
          %v1405 = vsel %vm1385, %v1379, 0.0
          %v1406 = vadd.f32 %v1404, %v1405
          %v1407 = vsel %vm1385, %v1380, 0.0
          %v1408 = vadd.f32 %v1406, %v1407
          %v1409 = vsel %vm1385, %v1381, 0.0
          %v1410 = vadd.f32 %v1408, %v1409
          %v1411 = vsel %vm1385, %v1382, 0.0
          %v1412 = vadd.f32 %v1410, %v1411
          %v1413 = vsel %vm1385, %v1383, 0.0
          %v1414 = vadd.f32 %v1412, %v1413
          %v1415 = vsel %vm1385, %v1384, 0.0
          %v1416 = vadd.f32 %v1414, %v1415
          %v1417 = vrot.slane %v1416, 4
          %v1418 = vadd.f32 %v1416, %v1417
          %v1419 = vrot.slane %v1418, 2
          %v1420 = vadd.f32 %v1418, %v1419
          %v1421 = vrot.slane %v1420, 1
          %v1422 = vadd.f32 %v1420, %v1421
          %v1423 = vadd.f32 %v1320, %v1422
          %vm1424 = vcmask 196608
          %1425 = vst.msk [vmem:[#allocation2] sm:$0x1] %vm1424, %v1423
        $region84: #{tpu_custom_call.1} parent=47 // pred_fallthru
          _
        %p1426 = scmp.eq.s32.totalorder %s25, 2
        // Predicated region
        $region85: #{tpu_custom_call.1} parent=47 // pred_check
          %p1427 = pneg %p1426
        $region86: #{tpu_custom_call.1} parent=47 // pred_check_branch
          %1429 = sbr.rel (%p1427) target = $region88
        $region87: #{tpu_custom_call.1} parent=47 // pred_region
          %v1430 = vld [vmem:[#allocation2] sm:$0x1]
          %v1431 = vmul.f32 %v1430, 0.0033333334
          %v1432 = vld [vmem:[#allocation8] sm:$0xff]
          %v1433 = vld [vmem:[#allocation8 + $0x8] sm:$0xff]
          %v1434 = vld [vmem:[#allocation8 + $0x10] sm:$0xff]
          %v1435 = vld [vmem:[#allocation8 + $0x18] sm:$0x1]
          %v1436 = vld [vmem:[#allocation9] sm:$0x1]
          %vm1437 = vcmask 203776
          %v1439 = vsel %vm1437, %v1431, 0
          %vm1441 = vcmask 1040384
          %v1443 = vsel %vm1441, %v1435, 0
          %1445 = vmatprep.subr.mxu0 0.0
          %1446 = vmatpush1.msra.mxu0 %v1432
          %1447 = vmatprep.subr.mxu0 0.0
          %1448 = vmatpush1.msra.mxu0 %v1433
          %1449 = vmatprep.subr.mxu0 0.0
          %1450 = vmatpush1.msra.mxu0 %v1434
          %1451 = vmatprep.subr.mxu0 0.0
          %1452 = vmatpush1.msra.mxu0 %v1443
          %1453 = vmatprep.subr.mxu0 0.0
          %1454 = vmatpush1.msra.mxu0 0.0
          %1455 = vmatprep.subr.mxu0 0.0
          %1456 = vmatpush1.msra.mxu0 0.0
          %1457 = vmatprep.subr.mxu0 0.0
          %1458 = vmatpush1.msra.mxu0 0.0
          %1459 = vmatprep.subr.mxu0 0.0
          %1460 = vmatpush1.msra.mxu0 0.0
          %1461 = vmatprep.subr.mxu0 0.0
          %1462 = vmatpush1.msra.mxu0 0.0
          %1463 = vmatprep.subr.mxu0 0.0
          %1464 = vmatpush1.msra.mxu0 0.0
          %1465 = vmatprep.subr.mxu0 0.0
          %1466 = vmatpush1.msra.mxu0 0.0
          %1467 = vmatprep.subr.mxu0 0.0
          %1468 = vmatpush1.msra.mxu0 0.0
          %1469 = vmatprep.subr.mxu0 0.0
          %1470 = vmatpush1.msra.mxu0 0.0
          %1471 = vmatprep.subr.mxu0 0.0
          %1472 = vmatpush1.msra.mxu0 0.0
          %1473 = vmatprep.subr.mxu0 0.0
          %1474 = vmatpush1.msra.mxu0 0.0
          %1475 = vmatprep.subr.mxu0 0.0
          %1476 = vmatpush1.msra.mxu0 0.0
          %1477 = vmatprep.subr.mxu0 0.0
          %1478 = vmatpush1.msra.mxu0 0.0
          %1479 = vmatprep.subr.mxu0 0.0
          %1480 = vmatpush1.msra.mxu0 0.0
          %1481 = vmatprep.subr.mxu0 0.0
          %1482 = vmatpush1.msra.mxu0 0.0
          %1483 = vmatprep.subr.mxu0 0.0
          %1484 = vmatpush1.msra.mxu0 0.0
          %1485 = vmatprep.subr.mxu0 0.0
          %1486 = vmatpush1.msra.mxu0 0.0
          %1487 = vmatprep.subr.mxu0 0.0
          %1488 = vmatpush1.msra.mxu0 0.0
          %1489 = vmatprep.subr.mxu0 0.0
          %1490 = vmatpush1.msra.mxu0 0.0
          %1491 = vmatprep.subr.mxu0 0.0
          %1492 = vmatpush1.msra.mxu0 0.0
          %1493 = vmatprep.subr.mxu0 0.0
          %1494 = vmatpush1.msra.mxu0 0.0
          %1495 = vmatprep.subr.mxu0 0.0
          %1496 = vmatpush1.msra.mxu0 0.0
          %1497 = vmatprep.subr.mxu0 0.0
          %1498 = vmatpush1.msra.mxu0 0.0
          %1499 = vmatprep.subr.mxu0 0.0
          %1500 = vmatpush1.msra.mxu0 0.0
          %1501 = vmatprep.subr.mxu0 0.0
          %1502 = vmatpush1.msra.mxu0 0.0
          %1503 = vmatprep.subr.mxu0 0.0
          %1504 = vmatpush1.msra.mxu0 0.0
          %1505 = vmatprep.subr.mxu0 0.0
          %1506 = vmatpush1.msra.mxu0 0.0
          %1507 = vmatprep.subr.mxu0 0.0
          %1508 = vmatpush1.msra.mxu0 0.0
          %1509 = vmatprep.mubr.f32.mxu0 0.0
          %1510 = vmatmul.mubr.f32.gmra.mrb[0].mxu0 %v1439
          %v1511 = vpop.f32.mrb[0].mxu0
          %v1512 = vadd.f32 %v1436, %v1511
          %v1513 = vpop.f32.mrb[0].mxu0
          %1514 = vdwg.mxu0
          %v1515 = vmax.f32 %v1512, 0.0
          %v1516 = vld [vmem:[#allocation11] sm:$0xff]
          %v1517 = vld [vmem:[#allocation11 + $0x8] sm:$0xff]
          %v1518 = vld [vmem:[#allocation11 + $0x10] sm:$0xff]
          %v1519 = vld [vmem:[#allocation11 + $0x18] sm:$0x1]
          %v1520 = vld [vmem:[#allocation12] sm:$0x1]
          %v1522 = vsel %vm1437, %v1515, 0
          %v1525 = vsel %vm1441, %v1519, 0
          %1527 = vmatprep.subr.mxu0 0.0
          %1528 = vmatpush1.msra.mxu0 %v1516
          %1529 = vmatprep.subr.mxu0 0.0
          %1530 = vmatpush1.msra.mxu0 %v1517
          %1531 = vmatprep.subr.mxu0 0.0
          %1532 = vmatpush1.msra.mxu0 %v1518
          %1533 = vmatprep.subr.mxu0 0.0
          %1534 = vmatpush1.msra.mxu0 %v1525
          %1535 = vmatprep.subr.mxu0 0.0
          %1536 = vmatpush1.msra.mxu0 0.0
          %1537 = vmatprep.subr.mxu0 0.0
          %1538 = vmatpush1.msra.mxu0 0.0
          %1539 = vmatprep.subr.mxu0 0.0
          %1540 = vmatpush1.msra.mxu0 0.0
          %1541 = vmatprep.subr.mxu0 0.0
          %1542 = vmatpush1.msra.mxu0 0.0
          %1543 = vmatprep.subr.mxu0 0.0
          %1544 = vmatpush1.msra.mxu0 0.0
          %1545 = vmatprep.subr.mxu0 0.0
          %1546 = vmatpush1.msra.mxu0 0.0
          %1547 = vmatprep.subr.mxu0 0.0
          %1548 = vmatpush1.msra.mxu0 0.0
          %1549 = vmatprep.subr.mxu0 0.0
          %1550 = vmatpush1.msra.mxu0 0.0
          %1551 = vmatprep.subr.mxu0 0.0
          %1552 = vmatpush1.msra.mxu0 0.0
          %1553 = vmatprep.subr.mxu0 0.0
          %1554 = vmatpush1.msra.mxu0 0.0
          %1555 = vmatprep.subr.mxu0 0.0
          %1556 = vmatpush1.msra.mxu0 0.0
          %1557 = vmatprep.subr.mxu0 0.0
          %1558 = vmatpush1.msra.mxu0 0.0
          %1559 = vmatprep.subr.mxu0 0.0
          %1560 = vmatpush1.msra.mxu0 0.0
          %1561 = vmatprep.subr.mxu0 0.0
          %1562 = vmatpush1.msra.mxu0 0.0
          %1563 = vmatprep.subr.mxu0 0.0
          %1564 = vmatpush1.msra.mxu0 0.0
          %1565 = vmatprep.subr.mxu0 0.0
          %1566 = vmatpush1.msra.mxu0 0.0
          %1567 = vmatprep.subr.mxu0 0.0
          %1568 = vmatpush1.msra.mxu0 0.0
          %1569 = vmatprep.subr.mxu0 0.0
          %1570 = vmatpush1.msra.mxu0 0.0
          %1571 = vmatprep.subr.mxu0 0.0
          %1572 = vmatpush1.msra.mxu0 0.0
          %1573 = vmatprep.subr.mxu0 0.0
          %1574 = vmatpush1.msra.mxu0 0.0
          %1575 = vmatprep.subr.mxu0 0.0
          %1576 = vmatpush1.msra.mxu0 0.0
          %1577 = vmatprep.subr.mxu0 0.0
          %1578 = vmatpush1.msra.mxu0 0.0
          %1579 = vmatprep.subr.mxu0 0.0
          %1580 = vmatpush1.msra.mxu0 0.0
          %1581 = vmatprep.subr.mxu0 0.0
          %1582 = vmatpush1.msra.mxu0 0.0
          %1583 = vmatprep.subr.mxu0 0.0
          %1584 = vmatpush1.msra.mxu0 0.0
          %1585 = vmatprep.subr.mxu0 0.0
          %1586 = vmatpush1.msra.mxu0 0.0
          %1587 = vmatprep.subr.mxu0 0.0
          %1588 = vmatpush1.msra.mxu0 0.0
          %1589 = vmatprep.subr.mxu0 0.0
          %1590 = vmatpush1.msra.mxu0 0.0
          %1591 = vmatprep.mubr.f32.mxu0 0.0
          %1592 = vmatmul.mubr.f32.gmra.mrb[0].mxu0 %v1522
          %v1593 = vpop.f32.mrb[0].mxu0
          %v1594 = vadd.f32 %v1520, %v1593
          %v1595 = vpop.f32.mrb[0].mxu0
          %1596 = vdwg.mxu0
          %vm1597 = vcmask 253952
          %1598 = vst.msk [vmem:[#allocation14] sm:$0x1] %vm1597, %v1594
        $region88: #{tpu_custom_call.1} parent=47 // pred_fallthru
          _
        // Predicated region
        $region89: #{tpu_custom_call.1} parent=47 // pred_check
          %p1599 = pneg %p190
        $region90: #{tpu_custom_call.1} parent=47 // pred_check_branch
          %1601 = sbr.rel (%p1599) target = $region92
        $region91: #{tpu_custom_call.1} parent=47 // pred_region
          %s1603 = ssub.s32 16, 16
          %1604 = vsyncadd [#allocation5], %s1603
          %s1606 = sshll.u32 [#allocation14], 4
          %s1607 = int_to_ptr.vmem [resolvable:$true] %s1606
          %1609 = dma.vmem_to_hbm [thread:$0]  %s1607, 16, %s7, [#allocation5]
        $region92: #{tpu_custom_call.1} parent=47 // pred_fallthru
          _
        // Predicated region
        $region93: #{tpu_custom_call.1} parent=47 // pred_check
          %p1610 = pneg %p190
        $region94: #{tpu_custom_call.1} parent=47 // pred_check_branch
          %1612 = sbr.rel (%p1610) target = $region96
        $region95: #{tpu_custom_call.1} parent=47 // pred_region
          %1613 = dma.done [#allocation5], 16
        $region96: #{tpu_custom_call.1} parent=47 // pred_fallthru
          _
      $region48: #{tpu_custom_call.1} parent=5 // pred_fallthru
        _
      %p1614 = scmp.le.s32.totalorder 2, %s20
      // Predicated region
      $region97: #{tpu_custom_call.1} parent=5 // pred_check
        %p1615 = pneg %p1614
      $region98: #{tpu_custom_call.1} parent=5 // pred_check_branch
        %1617 = sbr.rel (%p1615) target = $region100
      $region99: #{tpu_custom_call.1} parent=5 // pred_region
        %s1618 = ssub.s32 %s20, 2
      $region100: #{tpu_custom_call.1} parent=5 // pred_fallthru
        _
    $region6: #{tpu_custom_call.1} parent=1 // loop_footer
      %s24 = sadd.s32 1, %s20
    $region7: #{tpu_custom_call.1} parent=1 // loop_footer_branch
      %19 = sbr.rel target = $region3
    $region8: #{tpu_custom_call.1} parent=1 // loop_exit
      _
    %1619 = vsyncpa [#allocation4], 1
    %s1620 = scalar_lea.sflag [#allocation4], 1
    %1621 = vsyncpa %s1620, 1
    %1622 = vsyncpa [#allocation7], 1
    %1623 = vsyncpa [#allocation10], 1
    %1624 = vsyncpa [#allocation13], 1
    %1625 = vsyncpa [#allocation5], 1
    %s1626 = scalar_lea.sflag [#allocation5], 1
    %1627 = vsyncpa %s1626, 1

</llo_original>
